<compile_context>
chip_gen: v7x
topology: tpu7x:2x2x1
jax: 0.10.0
libtpu: 0.0.40
codegen_flags: <defaults>
</compile_context>

<pallas_src>
import jax
import jax.numpy as jnp
from jax import lax
from jax.experimental import pallas as pl
from jax.experimental.pallas import tpu as pltpu

BN_EPS = 1e-5
VMEM_LIMIT_BYTES = 48 * 1024 * 1024   # v7x has only 64 MiB physical VMEM per TC
TM_TARGET = 512                       # rows (N*Hout*Wout) per block, mult. of 8
TK_TARGET = 1152                      # contraction (9*Cin) per block, mult. of 128
TC_TARGET = 256                       # output channels per block, mult. of 128

FEATURES = (64, 128, 256, 512)


def _pick_tile(dim, target, quantum):
    """Largest tile <= target that divides `dim` and is a multiple of `quantum`;
    otherwise the full dim (always TPU-legal).  Grid = dim // tile exactly, so
    no remainder is ever silently dropped."""
    if dim <= target:
        return dim
    t = (min(dim, target) // quantum) * quantum
    while t >= quantum:
        if dim % t == 0:
            return t
        t -= quantum
    return dim


# ----------------------------------------------------------------------------
# Pallas kernels
# ----------------------------------------------------------------------------
def _conv_stats_kernel(p_ref, w_ref, y_ref, ps_ref, acc_ref):
    """One (tm, ct) tile of y = patches @ w (bf16 inputs, f32 accumulation),
    K-tiled.  On the last K step, writes y and the per-M-tile BatchNorm partial
    sums [sum(y); sum(y*y)] so batch statistics stay exact under M tiling."""
    ki = pl.program_id(2)

    @pl.when(ki == 0)
    def _():
        acc_ref[...] = jnp.zeros_like(acc_ref)

    acc_ref[...] += jnp.dot(p_ref[...], w_ref[...],
                            preferred_element_type=jnp.float32)

    @pl.when(ki == pl.num_programs(2) - 1)
    def _():
        y = acc_ref[...]
        y_ref[...] = y
        s = jnp.sum(y, axis=0, keepdims=True)
        s2 = jnp.sum(y * y, axis=0, keepdims=True)
        ps_ref[0] = jnp.concatenate([s, s2], axis=0)      # (2, ct)


def _scale_shift_prelu_kernel(y_ref, prm_ref, o_ref):
    """Elementwise BN apply + PReLU.  prm rows = (scale, shift, alpha)."""
    prm = prm_ref[...]
    scale = prm[0:1, :]
    shift = prm[1:2, :]
    alpha = prm[2:3, :]
    z = y_ref[...] * scale + shift
    o_ref[...] = jnp.where(z >= 0.0, z, alpha * z)


def _conv_bias_kernel(p_ref, w_ref, b_ref, o_ref, acc_ref):
    """K-tiled conv-as-matmul with bias (the stride-2 'pool' convs)."""
    ki = pl.program_id(2)

    @pl.when(ki == 0)
    def _():
        acc_ref[...] = jnp.zeros_like(acc_ref)

    acc_ref[...] += jnp.dot(p_ref[...], w_ref[...],
                            preferred_element_type=jnp.float32)

    @pl.when(ki == pl.num_programs(2) - 1)
    def _():
        o_ref[...] = acc_ref[...] + b_ref[...]


# ----------------------------------------------------------------------------
# JAX glue
# ----------------------------------------------------------------------------
def _im2col(x, stride):
    """x: (N, H, W, C) -> patches (N*Hout*Wout, 9*C), plus Hout, Wout.
    3x3 kernel, padding=1.  K ordering is (dy, dx, cin), matching a
    (3, 3, Cin, Cout) weight reshaped to (9*Cin, Cout).  Done in the caller's
    dtype (bf16) so the duplicated patches cost half the HBM bytes."""
    n, h, w, c = x.shape
    hout = (h + 2 - 3) // stride + 1
    wout = (w + 2 - 3) // stride + 1
    xp = jnp.pad(x, ((0, 0), (1, 1), (1, 1), (0, 0)))
    taps = []
    for dy in range(3):
        for dx in range(3):
            taps.append(
                lax.slice(
                    xp,
                    (0, dy, dx, 0),
                    (n, dy + (hout - 1) * stride + 1, dx + (wout - 1) * stride + 1, c),
                    (1, stride, stride, 1),
                )
            )
    patches = jnp.concatenate(taps, axis=-1).reshape(n * hout * wout, 9 * c)
    return patches, hout, wout


def conv3x3_bn_prelu(x, w, gamma, beta, alpha):
    """3x3 stride-1 conv (no bias) + BatchNorm (training-mode batch statistics)
    + PReLU, matching Conv2d(bias=False) -> BatchNorm2d -> PReLU."""
    n = x.shape[0]
    cin, cout = w.shape[2], w.shape[3]
    patches, hout, wout = _im2col(x.astype(jnp.bfloat16), stride=1)
    m, k = patches.shape
    tm = _pick_tile(m, TM_TARGET, 8)
    tk = _pick_tile(k, TK_TARGET, 128)
    ct = _pick_tile(cout, TC_TARGET, 128)
    nm, nk, nc = m // tm, k // tk, cout // ct
    w2 = w.reshape(9 * cin, cout).astype(jnp.bfloat16)

    # Pass 1: tiled matmul + per-M-tile BN partial sums.
    y, ps = pl.pallas_call(
        _conv_stats_kernel,
        out_shape=(jax.ShapeDtypeStruct((m, cout), jnp.float32),
                   jax.ShapeDtypeStruct((nm, 2, cout), jnp.float32)),
        grid_spec=pltpu.PrefetchScalarGridSpec(
            num_scalar_prefetch=0,
            grid=(nc, nm, nk),
            in_specs=[
                pl.BlockSpec((tm, tk), lambda j, mi, ki: (mi, ki)),   # patches
                pl.BlockSpec((tk, ct), lambda j, mi, ki: (ki, j)),    # weight
            ],
            out_specs=(
                pl.BlockSpec((tm, ct), lambda j, mi, ki: (mi, j)),       # y
                pl.BlockSpec((1, 2, ct), lambda j, mi, ki: (mi, 0, j)),  # stats
            ),
            scratch_shapes=[pltpu.VMEM((tm, ct), jnp.float32)],
        ),
        compiler_params=pltpu.CompilerParams(
            dimension_semantics=("parallel", "parallel", "arbitrary"),
            vmem_limit_bytes=VMEM_LIMIT_BYTES,
        ),
    )(patches, w2)

    # Per-channel BN finalize: O(cout) scalar math, negligible -> plain JAX.
    stats = jnp.sum(ps, axis=0)                              # (2, cout)
    inv_m = 1.0 / float(m)
    mean = stats[0] * inv_m
    var = jnp.maximum(stats[1] * inv_m - mean * mean, 0.0)   # clamp -> no NaN
    scale = gamma * lax.rsqrt(var + BN_EPS)
    shift = beta - mean * scale
    alpha_v = jnp.broadcast_to(jnp.asarray(alpha, jnp.float32), (cout,))
    prm = jnp.stack([scale, shift, alpha_v], axis=0)          # (3, cout) packed

    # Pass 2: elementwise scale/shift + PReLU.
    out = pl.pallas_call(
        _scale_shift_prelu_kernel,
        out_shape=jax.ShapeDtypeStruct((m, cout), jnp.float32),
        grid_spec=pltpu.PrefetchScalarGridSpec(
            num_scalar_prefetch=0,
            grid=(nc, nm),
            in_specs=[
                pl.BlockSpec((tm, ct), lambda j, mi: (mi, j)),
                pl.BlockSpec((3, ct), lambda j, mi: (0, j)),
            ],
            out_specs=pl.BlockSpec((tm, ct), lambda j, mi: (mi, j)),
        ),
        compiler_params=pltpu.CompilerParams(
            dimension_semantics=("parallel", "parallel"),
            vmem_limit_bytes=VMEM_LIMIT_BYTES,
        ),
    )(y, prm)
    return out.reshape(n, hout, wout, cout)


def conv3x3_stride2_bias(x, w, b):
    """3x3 stride-2 padding-1 conv with bias (the 'pool' conv)."""
    n = x.shape[0]
    cin, cout = w.shape[2], w.shape[3]
    patches, hout, wout = _im2col(x.astype(jnp.bfloat16), stride=2)
    m, k = patches.shape
    tm = _pick_tile(m, TM_TARGET, 8)
    tk = _pick_tile(k, TK_TARGET, 128)
    ct = _pick_tile(cout, TC_TARGET, 128)
    nm, nk, nc = m // tm, k // tk, cout // ct
    out = pl.pallas_call(
        _conv_bias_kernel,
        out_shape=jax.ShapeDtypeStruct((m, cout), jnp.float32),
        grid_spec=pltpu.PrefetchScalarGridSpec(
            num_scalar_prefetch=0,
            grid=(nc, nm, nk),
            in_specs=[
                pl.BlockSpec((tm, tk), lambda j, mi, ki: (mi, ki)),   # patches
                pl.BlockSpec((tk, ct), lambda j, mi, ki: (ki, j)),    # weight
                pl.BlockSpec((1, ct), lambda j, mi, ki: (0, j)),      # bias
            ],
            out_specs=pl.BlockSpec((tm, ct), lambda j, mi, ki: (mi, j)),
            scratch_shapes=[pltpu.VMEM((tm, ct), jnp.float32)],
        ),
        compiler_params=pltpu.CompilerParams(
            dimension_semantics=("parallel", "parallel", "arbitrary"),
            vmem_limit_bytes=VMEM_LIMIT_BYTES,
        ),
    )(patches, w.reshape(9 * cin, cout).astype(jnp.bfloat16),
      b.reshape(1, cout).astype(jnp.float32))
    return out.reshape(n, hout, wout, cout)


# ----------------------------------------------------------------------------
# Model: parameters + forward
# ----------------------------------------------------------------------------
def init_params(key, input_channels):
    keys = iter(jax.random.split(key, 64))

    def double_conv_params(cin, cout):
        w1 = 0.05 * jax.random.normal(next(keys), (3, 3, cin, cout), jnp.float32)
        w2 = 0.05 * jax.random.normal(next(keys), (3, 3, cout, cout), jnp.float32)
        gamma = jnp.ones((cout,), jnp.float32)   # BatchNorm default weight
        beta = jnp.zeros((cout,), jnp.float32)   # BatchNorm default bias
        alpha = jnp.float32(0.25)                # PReLU default init
        return dict(w1=w1, g1=gamma, b1=beta, a1=alpha,
                    w2=w2, g2=gamma, b2=beta, a2=alpha)

    params = {"downs": [], "pools": []}
    c = input_channels
    for f in FEATURES:
        params["downs"].append(double_conv_params(c, f))
        wp = 0.05 * jax.random.normal(next(keys), (3, 3, f, f), jnp.float32)
        bp = 0.05 * jax.random.normal(next(keys), (f,), jnp.float32)
        params["pools"].append((wp, bp))
        c = f
    params["bottleneck"] = double_conv_params(FEATURES[-1], FEATURES[-1] * 2)
    return params


def double_conv(x, p):
    x = conv3x3_bn_prelu(x, p["w1"], p["g1"], p["b1"], p["a1"])
    x = conv3x3_bn_prelu(x, p["w2"], p["g2"], p["b2"], p["a2"])
    return x


def data_encoder(x, params):
    """x: (N, H, W, Cin) NHWC.  Returns (bottleneck_out, [skip1..skip4])."""
    skips = []
    for i in range(len(FEATURES)):
        x = double_conv(x, params["downs"][i])
        skips.append(x)
        wp, bp = params["pools"][i]
        x = conv3x3_stride2_bias(x, wp, bp)
    x = double_conv(x, params["bottleneck"])
    return x, skips


# ----------------------------------------------------------------------------
# Main
# ----------------------------------------------------------------------------
if __name__ == "__main__":
    key = jax.random.PRNGKey(0)
    k_x, k_p = jax.random.split(key)

    input_channels = 4
    # NHWC input (PyTorch equivalent would be (2, 4, 16, 16) NCHW).
    x = jax.random.normal(k_x, (2, 16, 16, input_channels), jnp.float32)
    params = init_params(k_p, input_channels)

    out, skips = data_encoder(x, params)
    out = jax.block_until_ready(out)
    skips = [jax.block_until_ready(s) for s in skips]

    expected_skip_shapes = [(2, 16, 16, 64), (2, 8, 8, 128),
                            (2, 4, 4, 256), (2, 2, 2, 512)]
    assert out.shape == (2, 1, 1, 1024), out.shape
    assert [tuple(s.shape) for s in skips] == expected_skip_shapes
    assert all(bool(jnp.all(jnp.isfinite(s))) for s in [out] + skips)

    print("KERNEL_OK")
</pallas_src>

<mosaic_0001>
module attributes {stable_mosaic.version = 11 : i64} {
  func.func @_conv_stats_kernel(%arg0: i32, %arg1: i32, %arg2: i32, %arg3: memref<512x36xbf16, #tpu.memory_space<vmem>>, %arg4: memref<36x64xbf16, #tpu.memory_space<vmem>>, %arg5: memref<512x64xf32, #tpu.memory_space<vmem>>, %arg6: memref<1x2x64xf32, #tpu.memory_space<vmem>>, %arg7: memref<512x64xf32, #tpu.memory_space<vmem>>) attributes {dimension_semantics = [#tpu.dimension_semantics<parallel>, #tpu.dimension_semantics<parallel>, #tpu.dimension_semantics<arbitrary>], iteration_bounds = array<i64: 1, 1, 1>, scalar_prefetch = 0 : i64, scratch_operands = 1 : i64, tpu.core_type = #tpu.core_type<tc>, window_params = [{transform_indices = @transform_0, window_bounds = array<i64: 512, 36>}, {transform_indices = @transform_1, window_bounds = array<i64: 36, 64>}, {transform_indices = @transform_2, window_bounds = array<i64: 512, 64>}, {transform_indices = @transform_3, window_bounds = array<i64: 1, 2, 64>}]} {
    %c0_i32 = arith.constant 0 : i32
    %0 = arith.cmpi eq, %arg2, %c0_i32 : i32
    %1 = arith.extui %0 : i1 to i32
    %c0_i32_0 = arith.constant 0 : i32
    %2 = arith.cmpi ne, %1, %c0_i32_0 : i32
    scf.if %2 {
      %cst_10 = arith.constant 0.000000e+00 : f32
      %12 = vector.broadcast %cst_10 : f32 to vector<512x64xf32>
      %c0_11 = arith.constant 0 : index
      %c0_12 = arith.constant 0 : index
      %13 = vector.load %arg7[%c0_11, %c0_12] : memref<512x64xf32, #tpu.memory_space<vmem>>, vector<512x64xf32>
      tpu.vector_store %arg7[%c0_11, %c0_12], %12 {strides = array<i32>} : memref<512x64xf32, #tpu.memory_space<vmem>>, vector<512x64xf32>,
    } else {
    }
    %c0 = arith.constant 0 : index
    %c0_1 = arith.constant 0 : index
    %3 = vector.load %arg7[%c0, %c0_1] : memref<512x64xf32, #tpu.memory_space<vmem>>, vector<512x64xf32>
    %c0_2 = arith.constant 0 : index
    %c0_3 = arith.constant 0 : index
    %4 = vector.load %arg3[%c0_2, %c0_3] : memref<512x36xbf16, #tpu.memory_space<vmem>>, vector<512x36xbf16>
    %c0_4 = arith.constant 0 : index
    %c0_5 = arith.constant 0 : index
    %5 = vector.load %arg4[%c0_4, %c0_5] : memref<36x64xbf16, #tpu.memory_space<vmem>>, vector<36x64xbf16>
    %cst = arith.constant dense<0.000000e+00> : vector<512x64xf32>
    %6 = tpu.matmul %4, %5, %cst {dimension_numbers = #tpu.dot_dimension_numbers<[1], [0], [0], [1], [0, 0, 1, 1], [], []>} : vector<512x36xbf16>, vector<36x64xbf16>, vector<512x64xf32> -> vector<512x64xf32>
    %7 = arith.addf %3, %6 : vector<512x64xf32>
    %c0_6 = arith.constant 0 : index
    %c0_7 = arith.constant 0 : index
    %8 = vector.load %arg7[%c0_6, %c0_7] : memref<512x64xf32, #tpu.memory_space<vmem>>, vector<512x64xf32>
    tpu.vector_store %arg7[%c0_6, %c0_7], %7 {strides = array<i32>} : memref<512x64xf32, #tpu.memory_space<vmem>>, vector<512x64xf32>,
    %c0_i32_8 = arith.constant 0 : i32
    %9 = arith.cmpi eq, %arg2, %c0_i32_8 : i32
    %10 = arith.extui %9 : i1 to i32
    %c0_i32_9 = arith.constant 0 : i32
    %11 = arith.cmpi ne, %10, %c0_i32_9 : i32
    scf.if %11 {
      %c0_10 = arith.constant 0 : index
      %c0_11 = arith.constant 0 : index
      %12 = vector.load %arg7[%c0_10, %c0_11] : memref<512x64xf32, #tpu.memory_space<vmem>>, vector<512x64xf32>
      %c0_12 = arith.constant 0 : index
      %c0_13 = arith.constant 0 : index
      %13 = vector.load %arg5[%c0_12, %c0_13] : memref<512x64xf32, #tpu.memory_space<vmem>>, vector<512x64xf32>
      tpu.vector_store %arg5[%c0_12, %c0_13], %12 {strides = array<i32>} : memref<512x64xf32, #tpu.memory_space<vmem>>, vector<512x64xf32>,
      %cst_14 = arith.constant dense<0.000000e+00> : vector<64xf32>
      %14 = vector.multi_reduction <add>, %12, %cst_14 [0] : vector<512x64xf32> to vector<64xf32>
      %15 = vector.shape_cast %14 : vector<64xf32> to vector<1x64xf32>
      %16 = arith.mulf %12, %12 : vector<512x64xf32>
      %cst_15 = arith.constant dense<0.000000e+00> : vector<64xf32>
      %17 = vector.multi_reduction <add>, %16, %cst_15 [0] : vector<512x64xf32> to vector<64xf32>
      %18 = vector.shape_cast %17 : vector<64xf32> to vector<1x64xf32>
      %19 = tpu.concatenate %15, %18 in 0 : vector<1x64xf32>, vector<1x64xf32> -> vector<2x64xf32>
      %c0_16 = arith.constant 0 : index
      %c0_17 = arith.constant 0 : index
      %c0_18 = arith.constant 0 : index
      %20 = vector.load %arg6[%c0_16, %c0_17, %c0_18] : memref<1x2x64xf32, #tpu.memory_space<vmem>>, vector<1x2x64xf32>
      %21 = vector.shape_cast %20 : vector<1x2x64xf32> to vector<2x64xf32>
      %22 = vector.shape_cast %19 : vector<2x64xf32> to vector<1x2x64xf32>
      tpu.vector_store %arg6[%c0_16, %c0_17, %c0_18], %22 {strides = array<i32>} : memref<1x2x64xf32, #tpu.memory_space<vmem>>, vector<1x2x64xf32>,
    } else {
    }
    return
  }
  func.func @transform_0(%arg0: i32, %arg1: i32, %arg2: i32) -> (i32, i32) {
    %c0_i32 = arith.constant 0 : i32
    return %arg1, %arg2 : i32, i32
  }
  func.func @transform_1(%arg0: i32, %arg1: i32, %arg2: i32) -> (i32, i32) {
    %c0_i32 = arith.constant 0 : i32
    return %arg2, %arg0 : i32, i32
  }
  func.func @transform_2(%arg0: i32, %arg1: i32, %arg2: i32) -> (i32, i32) {
    %c0_i32 = arith.constant 0 : i32
    return %arg1, %arg0 : i32, i32
  }
  func.func @transform_3(%arg0: i32, %arg1: i32, %arg2: i32) -> (i32, i32, i32) {
    %c0_i32 = arith.constant 0 : i32
    %c0_i32_0 = arith.constant 0 : i32
    return %arg1, %c0_i32, %arg0 : i32, i32, i32
  }
}

</mosaic_0001>

<llo_original>
// kernel: tpu_custom_call.1
$region0: #{tpu_custom_call.1}
  #allocation0 [shape = 'u32[]', space=smem, size = 0x4, offset = 0x4, fixed_abs, tag = 'smem constant byte address 0x4 - core index']
  #allocation1 [shape = 'u32[144,128]{1,0:T(1,128)}', space=vmem, size = 0x12000, scoped, tag = 'internal scratch']
  #allocation2 [shape = 'f32[512,64]{1,0:T(8,128)}', space=vmem, size = 0x40000, scoped, tag = 'scratch operand']
  %s0 = inlined_call_operand.vmem [shape: bf16[512,36], index: 0, kind: input, shape index: {}]
  %s1 = inlined_call_operand.vmem [shape: bf16[36,64], index: 1, kind: input, shape index: {}]
  %s2 = inlined_call_operand.vmem [shape: f32[512,64], index: 2, kind: output, shape index: {0}]
  %s3 = inlined_call_operand.hbm [shape: f32[1,2,64], index: 3, kind: output, shape index: {1}]
  %4 = xla_tuple %s2, %s3
  %s5 = sld [smem:[#allocation0]]
  $region34: #{tpu_custom_call.1} parent=0
    _
  %s7 = ssub.s32 1, %s5
  %s8 = scalar_select 0, %s7, %s5
  $region1: #{tpu_custom_call.1} parent=0
    #allocation3 [shape = 'u8[1024]{0}', space=vmem, size = 0x400, scoped, tag = 'output window, operand 1, single buffered']
    #allocation4 [shape = 's32[1]{0}', space=sflag, size = 0x4, scoped, tag = 'scoped memory for tpu_custom_call.1']
    %9 = vsyncpa [#allocation4], 0
    // Predicated region
    $region2: #{tpu_custom_call.1} parent=1 // pred_check
      _
    $region3: #{tpu_custom_call.1} parent=1 // pred_check_branch
      %11 = sbr.rel (0) target = $region5
    $region4: #{tpu_custom_call.1} parent=1 // pred_region
      _
    $region5: #{tpu_custom_call.1} parent=1 // pred_fallthru
      _
    // Predicated region
    $region6: #{tpu_custom_call.1} parent=1 // pred_check
      _
    $region7: #{tpu_custom_call.1} parent=1 // pred_check_branch
      %13 = sbr.rel (0) target = $region9
    $region8: #{tpu_custom_call.1} parent=1 // pred_region
      _
    $region9: #{tpu_custom_call.1} parent=1 // pred_fallthru
      _
    %p15 = scmp.eq.s32.totalorder 0, 0
    // Predicated region
    $region10: #{tpu_custom_call.1} parent=1 // pred_check
      %p16 = pneg %p15
    $region11: #{tpu_custom_call.1} parent=1 // pred_check_branch
      %18 = sbr.rel (%p16) target = $region13
    $region12: #{tpu_custom_call.1} parent=1 // pred_region
      %vm19 = vcmask 523264
      %20 = vst.msk [vmem:[#allocation2] sm:$0xff] %vm19, 0.0
      %21 = vst.msk [vmem:[#allocation2 + $0x8] sm:$0xff] %vm19, 0.0
      %22 = vst.msk [vmem:[#allocation2 + $0x10] sm:$0xff] %vm19, 0.0
      %23 = vst.msk [vmem:[#allocation2 + $0x18] sm:$0xff] %vm19, 0.0
      %24 = vst.msk [vmem:[#allocation2 + $0x20] sm:$0xff] %vm19, 0.0
      %25 = vst.msk [vmem:[#allocation2 + $0x28] sm:$0xff] %vm19, 0.0
      %26 = vst.msk [vmem:[#allocation2 + $0x30] sm:$0xff] %vm19, 0.0
      %27 = vst.msk [vmem:[#allocation2 + $0x38] sm:$0xff] %vm19, 0.0
      %28 = vst.msk [vmem:[#allocation2 + $0x40] sm:$0xff] %vm19, 0.0
      %29 = vst.msk [vmem:[#allocation2 + $0x48] sm:$0xff] %vm19, 0.0
      %30 = vst.msk [vmem:[#allocation2 + $0x50] sm:$0xff] %vm19, 0.0
      %31 = vst.msk [vmem:[#allocation2 + $0x58] sm:$0xff] %vm19, 0.0
      %32 = vst.msk [vmem:[#allocation2 + $0x60] sm:$0xff] %vm19, 0.0
      %33 = vst.msk [vmem:[#allocation2 + $0x68] sm:$0xff] %vm19, 0.0
      %34 = vst.msk [vmem:[#allocation2 + $0x70] sm:$0xff] %vm19, 0.0
      %35 = vst.msk [vmem:[#allocation2 + $0x78] sm:$0xff] %vm19, 0.0
      %36 = vst.msk [vmem:[#allocation2 + $0x80] sm:$0xff] %vm19, 0.0
      %37 = vst.msk [vmem:[#allocation2 + $0x88] sm:$0xff] %vm19, 0.0
      %38 = vst.msk [vmem:[#allocation2 + $0x90] sm:$0xff] %vm19, 0.0
      %39 = vst.msk [vmem:[#allocation2 + $0x98] sm:$0xff] %vm19, 0.0
      %40 = vst.msk [vmem:[#allocation2 + $0xa0] sm:$0xff] %vm19, 0.0
      %41 = vst.msk [vmem:[#allocation2 + $0xa8] sm:$0xff] %vm19, 0.0
      %42 = vst.msk [vmem:[#allocation2 + $0xb0] sm:$0xff] %vm19, 0.0
      %43 = vst.msk [vmem:[#allocation2 + $0xb8] sm:$0xff] %vm19, 0.0
      %44 = vst.msk [vmem:[#allocation2 + $0xc0] sm:$0xff] %vm19, 0.0
      %45 = vst.msk [vmem:[#allocation2 + $0xc8] sm:$0xff] %vm19, 0.0
      %46 = vst.msk [vmem:[#allocation2 + $0xd0] sm:$0xff] %vm19, 0.0
      %47 = vst.msk [vmem:[#allocation2 + $0xd8] sm:$0xff] %vm19, 0.0
      %48 = vst.msk [vmem:[#allocation2 + $0xe0] sm:$0xff] %vm19, 0.0
      %49 = vst.msk [vmem:[#allocation2 + $0xe8] sm:$0xff] %vm19, 0.0
      %50 = vst.msk [vmem:[#allocation2 + $0xf0] sm:$0xff] %vm19, 0.0
      %51 = vst.msk [vmem:[#allocation2 + $0xf8] sm:$0xff] %vm19, 0.0
      %52 = vst.msk [vmem:[#allocation2 + $0x100] sm:$0xff] %vm19, 0.0
      %53 = vst.msk [vmem:[#allocation2 + $0x108] sm:$0xff] %vm19, 0.0
      %54 = vst.msk [vmem:[#allocation2 + $0x110] sm:$0xff] %vm19, 0.0
      %55 = vst.msk [vmem:[#allocation2 + $0x118] sm:$0xff] %vm19, 0.0
      %56 = vst.msk [vmem:[#allocation2 + $0x120] sm:$0xff] %vm19, 0.0
      %57 = vst.msk [vmem:[#allocation2 + $0x128] sm:$0xff] %vm19, 0.0
      %58 = vst.msk [vmem:[#allocation2 + $0x130] sm:$0xff] %vm19, 0.0
      %59 = vst.msk [vmem:[#allocation2 + $0x138] sm:$0xff] %vm19, 0.0
      %60 = vst.msk [vmem:[#allocation2 + $0x140] sm:$0xff] %vm19, 0.0
      %61 = vst.msk [vmem:[#allocation2 + $0x148] sm:$0xff] %vm19, 0.0
      %62 = vst.msk [vmem:[#allocation2 + $0x150] sm:$0xff] %vm19, 0.0
      %63 = vst.msk [vmem:[#allocation2 + $0x158] sm:$0xff] %vm19, 0.0
      %64 = vst.msk [vmem:[#allocation2 + $0x160] sm:$0xff] %vm19, 0.0
      %65 = vst.msk [vmem:[#allocation2 + $0x168] sm:$0xff] %vm19, 0.0
      %66 = vst.msk [vmem:[#allocation2 + $0x170] sm:$0xff] %vm19, 0.0
      %67 = vst.msk [vmem:[#allocation2 + $0x178] sm:$0xff] %vm19, 0.0
      %68 = vst.msk [vmem:[#allocation2 + $0x180] sm:$0xff] %vm19, 0.0
      %69 = vst.msk [vmem:[#allocation2 + $0x188] sm:$0xff] %vm19, 0.0
      %70 = vst.msk [vmem:[#allocation2 + $0x190] sm:$0xff] %vm19, 0.0
      %71 = vst.msk [vmem:[#allocation2 + $0x198] sm:$0xff] %vm19, 0.0
      %72 = vst.msk [vmem:[#allocation2 + $0x1a0] sm:$0xff] %vm19, 0.0
      %73 = vst.msk [vmem:[#allocation2 + $0x1a8] sm:$0xff] %vm19, 0.0
      %74 = vst.msk [vmem:[#allocation2 + $0x1b0] sm:$0xff] %vm19, 0.0
      %75 = vst.msk [vmem:[#allocation2 + $0x1b8] sm:$0xff] %vm19, 0.0
      %76 = vst.msk [vmem:[#allocation2 + $0x1c0] sm:$0xff] %vm19, 0.0
      %77 = vst.msk [vmem:[#allocation2 + $0x1c8] sm:$0xff] %vm19, 0.0
      %78 = vst.msk [vmem:[#allocation2 + $0x1d0] sm:$0xff] %vm19, 0.0
      %79 = vst.msk [vmem:[#allocation2 + $0x1d8] sm:$0xff] %vm19, 0.0
      %80 = vst.msk [vmem:[#allocation2 + $0x1e0] sm:$0xff] %vm19, 0.0
      %81 = vst.msk [vmem:[#allocation2 + $0x1e8] sm:$0xff] %vm19, 0.0
      %82 = vst.msk [vmem:[#allocation2 + $0x1f0] sm:$0xff] %vm19, 0.0
      %83 = vst.msk [vmem:[#allocation2 + $0x1f8] sm:$0xff] %vm19, 0.0
    $region13: #{tpu_custom_call.1} parent=1 // pred_fallthru
      _
    %v84 = vld [vmem:[#allocation2] sm:$0xff]
    %v85 = vld [vmem:[#allocation2 + $0x8] sm:$0xff]
    %v86 = vld [vmem:[#allocation2 + $0x10] sm:$0xff]
    %v87 = vld [vmem:[#allocation2 + $0x18] sm:$0xff]
    %v88 = vld [vmem:[#allocation2 + $0x20] sm:$0xff]
    %v89 = vld [vmem:[#allocation2 + $0x28] sm:$0xff]
    %v90 = vld [vmem:[#allocation2 + $0x30] sm:$0xff]
    %v91 = vld [vmem:[#allocation2 + $0x38] sm:$0xff]
    %v92 = vld [vmem:[#allocation2 + $0x40] sm:$0xff]
    %v93 = vld [vmem:[#allocation2 + $0x48] sm:$0xff]
    %v94 = vld [vmem:[#allocation2 + $0x50] sm:$0xff]
    %v95 = vld [vmem:[#allocation2 + $0x58] sm:$0xff]
    %v96 = vld [vmem:[#allocation2 + $0x60] sm:$0xff]
    %v97 = vld [vmem:[#allocation2 + $0x68] sm:$0xff]
    %v98 = vld [vmem:[#allocation2 + $0x70] sm:$0xff]
    %v99 = vld [vmem:[#allocation2 + $0x78] sm:$0xff]
    %v100 = vld [vmem:[#allocation2 + $0x80] sm:$0xff]
    %v101 = vld [vmem:[#allocation2 + $0x88] sm:$0xff]
    %v102 = vld [vmem:[#allocation2 + $0x90] sm:$0xff]
    %v103 = vld [vmem:[#allocation2 + $0x98] sm:$0xff]
    %v104 = vld [vmem:[#allocation2 + $0xa0] sm:$0xff]
    %v105 = vld [vmem:[#allocation2 + $0xa8] sm:$0xff]
    %v106 = vld [vmem:[#allocation2 + $0xb0] sm:$0xff]
    %v107 = vld [vmem:[#allocation2 + $0xb8] sm:$0xff]
    %v108 = vld [vmem:[#allocation2 + $0xc0] sm:$0xff]
    %v109 = vld [vmem:[#allocation2 + $0xc8] sm:$0xff]
    %v110 = vld [vmem:[#allocation2 + $0xd0] sm:$0xff]
    %v111 = vld [vmem:[#allocation2 + $0xd8] sm:$0xff]
    %v112 = vld [vmem:[#allocation2 + $0xe0] sm:$0xff]
    %v113 = vld [vmem:[#allocation2 + $0xe8] sm:$0xff]
    %v114 = vld [vmem:[#allocation2 + $0xf0] sm:$0xff]
    %v115 = vld [vmem:[#allocation2 + $0xf8] sm:$0xff]
    %v116 = vld [vmem:[#allocation2 + $0x100] sm:$0xff]
    %v117 = vld [vmem:[#allocation2 + $0x108] sm:$0xff]
    %v118 = vld [vmem:[#allocation2 + $0x110] sm:$0xff]
    %v119 = vld [vmem:[#allocation2 + $0x118] sm:$0xff]
    %v120 = vld [vmem:[#allocation2 + $0x120] sm:$0xff]
    %v121 = vld [vmem:[#allocation2 + $0x128] sm:$0xff]
    %v122 = vld [vmem:[#allocation2 + $0x130] sm:$0xff]
    %v123 = vld [vmem:[#allocation2 + $0x138] sm:$0xff]
    %v124 = vld [vmem:[#allocation2 + $0x140] sm:$0xff]
    %v125 = vld [vmem:[#allocation2 + $0x148] sm:$0xff]
    %v126 = vld [vmem:[#allocation2 + $0x150] sm:$0xff]
    %v127 = vld [vmem:[#allocation2 + $0x158] sm:$0xff]
    %v128 = vld [vmem:[#allocation2 + $0x160] sm:$0xff]
    %v129 = vld [vmem:[#allocation2 + $0x168] sm:$0xff]
    %v130 = vld [vmem:[#allocation2 + $0x170] sm:$0xff]
    %v131 = vld [vmem:[#allocation2 + $0x178] sm:$0xff]
    %v132 = vld [vmem:[#allocation2 + $0x180] sm:$0xff]
    %v133 = vld [vmem:[#allocation2 + $0x188] sm:$0xff]
    %v134 = vld [vmem:[#allocation2 + $0x190] sm:$0xff]
    %v135 = vld [vmem:[#allocation2 + $0x198] sm:$0xff]
    %v136 = vld [vmem:[#allocation2 + $0x1a0] sm:$0xff]
    %v137 = vld [vmem:[#allocation2 + $0x1a8] sm:$0xff]
    %v138 = vld [vmem:[#allocation2 + $0x1b0] sm:$0xff]
    %v139 = vld [vmem:[#allocation2 + $0x1b8] sm:$0xff]
    %v140 = vld [vmem:[#allocation2 + $0x1c0] sm:$0xff]
    %v141 = vld [vmem:[#allocation2 + $0x1c8] sm:$0xff]
    %v142 = vld [vmem:[#allocation2 + $0x1d0] sm:$0xff]
    %v143 = vld [vmem:[#allocation2 + $0x1d8] sm:$0xff]
    %v144 = vld [vmem:[#allocation2 + $0x1e0] sm:$0xff]
    %v145 = vld [vmem:[#allocation2 + $0x1e8] sm:$0xff]
    %v146 = vld [vmem:[#allocation2 + $0x1f0] sm:$0xff]
    %v147 = vld [vmem:[#allocation2 + $0x1f8] sm:$0xff]
    %v148 = vld [vmem:[%s0] sm:$0xf]
    %v149 = vld [vmem:[%s0 + $0x4] sm:$0xf]
    %v150 = vld [vmem:[%s0 + $0x8] sm:$0xf]
    %v151 = vld [vmem:[%s0 + $0xc] sm:$0xf]
    %v152 = vld [vmem:[%s0 + $0x10] sm:$0xf]
    %v153 = vld [vmem:[%s0 + $0x14] sm:$0xf]
    %v154 = vld [vmem:[%s0 + $0x18] sm:$0xf]
    %v155 = vld [vmem:[%s0 + $0x1c] sm:$0xf]
    %v156 = vld [vmem:[%s0 + $0x20] sm:$0xf]
    %v157 = vld [vmem:[%s0 + $0x24] sm:$0xf]
    %v158 = vld [vmem:[%s0 + $0x28] sm:$0xf]
    %v159 = vld [vmem:[%s0 + $0x2c] sm:$0xf]
    %v160 = vld [vmem:[%s0 + $0x30] sm:$0xf]
    %v161 = vld [vmem:[%s0 + $0x34] sm:$0xf]
    %v162 = vld [vmem:[%s0 + $0x38] sm:$0xf]
    %v163 = vld [vmem:[%s0 + $0x3c] sm:$0xf]
    %v164 = vld [vmem:[%s0 + $0x40] sm:$0xf]
    %v165 = vld [vmem:[%s0 + $0x44] sm:$0xf]
    %v166 = vld [vmem:[%s0 + $0x48] sm:$0xf]
    %v167 = vld [vmem:[%s0 + $0x4c] sm:$0xf]
    %v168 = vld [vmem:[%s0 + $0x50] sm:$0xf]
    %v169 = vld [vmem:[%s0 + $0x54] sm:$0xf]
    %v170 = vld [vmem:[%s0 + $0x58] sm:$0xf]
    %v171 = vld [vmem:[%s0 + $0x5c] sm:$0xf]
    %v172 = vld [vmem:[%s0 + $0x60] sm:$0xf]
    %v173 = vld [vmem:[%s0 + $0x64] sm:$0xf]
    %v174 = vld [vmem:[%s0 + $0x68] sm:$0xf]
    %v175 = vld [vmem:[%s0 + $0x6c] sm:$0xf]
    %v176 = vld [vmem:[%s0 + $0x70] sm:$0xf]
    %v177 = vld [vmem:[%s0 + $0x74] sm:$0xf]
    %v178 = vld [vmem:[%s0 + $0x78] sm:$0xf]
    %v179 = vld [vmem:[%s0 + $0x7c] sm:$0xf]
    %v180 = vld [vmem:[%s0 + $0x80] sm:$0xf]
    %v181 = vld [vmem:[%s0 + $0x84] sm:$0xf]
    %v182 = vld [vmem:[%s0 + $0x88] sm:$0xf]
    %v183 = vld [vmem:[%s0 + $0x8c] sm:$0xf]
    %v184 = vld [vmem:[%s0 + $0x90] sm:$0xf]
    %v185 = vld [vmem:[%s0 + $0x94] sm:$0xf]
    %v186 = vld [vmem:[%s0 + $0x98] sm:$0xf]
    %v187 = vld [vmem:[%s0 + $0x9c] sm:$0xf]
    %v188 = vld [vmem:[%s0 + $0xa0] sm:$0xf]
    %v189 = vld [vmem:[%s0 + $0xa4] sm:$0xf]
    %v190 = vld [vmem:[%s0 + $0xa8] sm:$0xf]
    %v191 = vld [vmem:[%s0 + $0xac] sm:$0xf]
    %v192 = vld [vmem:[%s0 + $0xb0] sm:$0xf]
    %v193 = vld [vmem:[%s0 + $0xb4] sm:$0xf]
    %v194 = vld [vmem:[%s0 + $0xb8] sm:$0xf]
    %v195 = vld [vmem:[%s0 + $0xbc] sm:$0xf]
    %v196 = vld [vmem:[%s0 + $0xc0] sm:$0xf]
    %v197 = vld [vmem:[%s0 + $0xc4] sm:$0xf]
    %v198 = vld [vmem:[%s0 + $0xc8] sm:$0xf]
    %v199 = vld [vmem:[%s0 + $0xcc] sm:$0xf]
    %v200 = vld [vmem:[%s0 + $0xd0] sm:$0xf]
    %v201 = vld [vmem:[%s0 + $0xd4] sm:$0xf]
    %v202 = vld [vmem:[%s0 + $0xd8] sm:$0xf]
    %v203 = vld [vmem:[%s0 + $0xdc] sm:$0xf]
    %v204 = vld [vmem:[%s0 + $0xe0] sm:$0xf]
    %v205 = vld [vmem:[%s0 + $0xe4] sm:$0xf]
    %v206 = vld [vmem:[%s0 + $0xe8] sm:$0xf]
    %v207 = vld [vmem:[%s0 + $0xec] sm:$0xf]
    %v208 = vld [vmem:[%s0 + $0xf0] sm:$0xf]
    %v209 = vld [vmem:[%s0 + $0xf4] sm:$0xf]
    %v210 = vld [vmem:[%s0 + $0xf8] sm:$0xf]
    %v211 = vld [vmem:[%s0 + $0xfc] sm:$0xf]
    %v212 = vld [vmem:[%s1] sm:$0xf]
    %v213 = vld [vmem:[%s1 + $0x4] sm:$0xf]
    %v214 = vld [vmem:[%s1 + $0x8] sm:$0xf]
    %v215 = vld [vmem:[%s1 + $0xc] sm:$0xf]
    %v216 = vld [vmem:[%s1 + $0x10] sm:$0x3]
    %v281 = vunpack.c.l.b16 %v148
    %v282 = vunpack.c.l.b16 %v149
    %v283 = vunpack.c.l.b16 %v150
    %v284 = vunpack.c.l.b16 %v151
    %v285 = vunpack.c.l.b16 %v152
    %v286 = vunpack.c.l.b16 %v153
    %v287 = vunpack.c.l.b16 %v154
    %v288 = vunpack.c.l.b16 %v155
    %v289 = vunpack.c.l.b16 %v156
    %v290 = vunpack.c.l.b16 %v157
    %v291 = vunpack.c.l.b16 %v158
    %v292 = vunpack.c.l.b16 %v159
    %v293 = vunpack.c.l.b16 %v160
    %v294 = vunpack.c.l.b16 %v161
    %v295 = vunpack.c.l.b16 %v162
    %v296 = vunpack.c.l.b16 %v163
    %v297 = vunpack.c.l.b16 %v164
    %v298 = vunpack.c.l.b16 %v165
    %v299 = vunpack.c.l.b16 %v166
    %v300 = vunpack.c.l.b16 %v167
    %v301 = vunpack.c.l.b16 %v168
    %v302 = vunpack.c.l.b16 %v169
    %v303 = vunpack.c.l.b16 %v170
    %v304 = vunpack.c.l.b16 %v171
    %v305 = vunpack.c.l.b16 %v172
    %v306 = vunpack.c.l.b16 %v173
    %v307 = vunpack.c.l.b16 %v174
    %v308 = vunpack.c.l.b16 %v175
    %v309 = vunpack.c.l.b16 %v176
    %v310 = vunpack.c.l.b16 %v177
    %v311 = vunpack.c.l.b16 %v178
    %v312 = vunpack.c.l.b16 %v179
    %v313 = vunpack.c.l.b16 %v180
    %v314 = vunpack.c.l.b16 %v181
    %v315 = vunpack.c.l.b16 %v182
    %v316 = vunpack.c.l.b16 %v183
    %v317 = vunpack.c.l.b16 %v184
    %v318 = vunpack.c.l.b16 %v185
    %v319 = vunpack.c.l.b16 %v186
    %v320 = vunpack.c.l.b16 %v187
    %v321 = vunpack.c.l.b16 %v188
    %v322 = vunpack.c.l.b16 %v189
    %v323 = vunpack.c.l.b16 %v190
    %v324 = vunpack.c.l.b16 %v191
    %v325 = vunpack.c.l.b16 %v192
    %v326 = vunpack.c.l.b16 %v193
    %v327 = vunpack.c.l.b16 %v194
    %v328 = vunpack.c.l.b16 %v195
    %v329 = vunpack.c.l.b16 %v196
    %v330 = vunpack.c.l.b16 %v197
    %v331 = vunpack.c.l.b16 %v198
    %v332 = vunpack.c.l.b16 %v199
    %v333 = vunpack.c.l.b16 %v200
    %v334 = vunpack.c.l.b16 %v201
    %v335 = vunpack.c.l.b16 %v202
    %v336 = vunpack.c.l.b16 %v203
    %v337 = vunpack.c.l.b16 %v204
    %v338 = vunpack.c.l.b16 %v205
    %v339 = vunpack.c.l.b16 %v206
    %v340 = vunpack.c.l.b16 %v207
    %v341 = vunpack.c.l.b16 %v208
    %v342 = vunpack.c.l.b16 %v209
    %v343 = vunpack.c.l.b16 %v210
    %v344 = vunpack.c.l.b16 %v211
    %v345 = vpack.c.b16 %v282, %v281
    %v346 = vpack.c.b16 %v284, %v283
    %v347 = vpack.c.b16 %v286, %v285
    %v348 = vpack.c.b16 %v288, %v287
    %v349 = vpack.c.b16 %v290, %v289
    %v350 = vpack.c.b16 %v292, %v291
    %v351 = vpack.c.b16 %v294, %v293
    %v352 = vpack.c.b16 %v296, %v295
    %v353 = vpack.c.b16 %v298, %v297
    %v354 = vpack.c.b16 %v300, %v299
    %v355 = vpack.c.b16 %v302, %v301
    %v356 = vpack.c.b16 %v304, %v303
    %v357 = vpack.c.b16 %v306, %v305
    %v358 = vpack.c.b16 %v308, %v307
    %v359 = vpack.c.b16 %v310, %v309
    %v360 = vpack.c.b16 %v312, %v311
    %v361 = vpack.c.b16 %v314, %v313
    %v362 = vpack.c.b16 %v316, %v315
    %v363 = vpack.c.b16 %v318, %v317
    %v364 = vpack.c.b16 %v320, %v319
    %v365 = vpack.c.b16 %v322, %v321
    %v366 = vpack.c.b16 %v324, %v323
    %v367 = vpack.c.b16 %v326, %v325
    %v368 = vpack.c.b16 %v328, %v327
    %v369 = vpack.c.b16 %v330, %v329
    %v370 = vpack.c.b16 %v332, %v331
    %v371 = vpack.c.b16 %v334, %v333
    %v372 = vpack.c.b16 %v336, %v335
    %v373 = vpack.c.b16 %v338, %v337
    %v374 = vpack.c.b16 %v340, %v339
    %v375 = vpack.c.b16 %v342, %v341
    %v376 = vpack.c.b16 %v344, %v343
    %v382 = vunpack.c.l.b16 %v212
    %v383 = vunpack.c.l.b16 %v213
    %v384 = vunpack.c.l.b16 %v214
    %v385 = vunpack.c.l.b16 %v215
    %v386 = vunpack.c.l.b16 %v216
    %v387 = vpack.c.b16 %v383, %v382
    %v388 = vpack.c.b16 %v385, %v384
    %v389 = vpack.c.b16 %v386, %v386
    %vm392 = vcmask 293888
    %v394 = vsel %vm392, %v345, 0
    %v397 = vsel %vm392, %v346, 0
    %v400 = vsel %vm392, %v347, 0
    %v403 = vsel %vm392, %v348, 0
    %v406 = vsel %vm392, %v349, 0
    %v409 = vsel %vm392, %v350, 0
    %v412 = vsel %vm392, %v351, 0
    %v415 = vsel %vm392, %v352, 0
    %v418 = vsel %vm392, %v353, 0
    %v421 = vsel %vm392, %v354, 0
    %v424 = vsel %vm392, %v355, 0
    %v427 = vsel %vm392, %v356, 0
    %v430 = vsel %vm392, %v357, 0
    %v433 = vsel %vm392, %v358, 0
    %v436 = vsel %vm392, %v359, 0
    %v439 = vsel %vm392, %v360, 0
    %v442 = vsel %vm392, %v361, 0
    %v445 = vsel %vm392, %v362, 0
    %v448 = vsel %vm392, %v363, 0
    %v451 = vsel %vm392, %v364, 0
    %v454 = vsel %vm392, %v365, 0
    %v457 = vsel %vm392, %v366, 0
    %v460 = vsel %vm392, %v367, 0
    %v463 = vsel %vm392, %v368, 0
    %v466 = vsel %vm392, %v369, 0
    %v469 = vsel %vm392, %v370, 0
    %v472 = vsel %vm392, %v371, 0
    %v475 = vsel %vm392, %v372, 0
    %v478 = vsel %vm392, %v373, 0
    %v481 = vsel %vm392, %v374, 0
    %v484 = vsel %vm392, %v375, 0
    %v487 = vsel %vm392, %v376, 0
    %vm489 = vcmask 1041408
    %v491 = vsel %vm489, %v389, 0
    %493 = vmatprep.subr.bf16.mxu0 0
    %494 = vmatpush1.bf16.msra.mxu0 %v387
    %495 = vmatprep.subr.bf16.mxu0 0
    %496 = vmatpush1.bf16.msra.mxu0 %v388
    %497 = vmatprep.subr.bf16.mxu0 0
    %498 = vmatpush1.bf16.msra.mxu0 %v491
    %499 = vmatprep.subr.bf16.mxu0 0
    %500 = vmatpush1.bf16.msra.mxu0 0
    %501 = vmatprep.subr.bf16.mxu0 0
    %502 = vmatpush1.bf16.msra.mxu0 0
    %503 = vmatprep.subr.bf16.mxu0 0
    %504 = vmatpush1.bf16.msra.mxu0 0
    %505 = vmatprep.subr.bf16.mxu0 0
    %506 = vmatpush1.bf16.msra.mxu0 0
    %507 = vmatprep.subr.bf16.mxu0 0
    %508 = vmatpush1.bf16.msra.mxu0 0
    %509 = vmatprep.subr.bf16.mxu0 0
    %510 = vmatpush1.bf16.msra.mxu0 0
    %511 = vmatprep.subr.bf16.mxu0 0
    %512 = vmatpush1.bf16.msra.mxu0 0
    %513 = vmatprep.subr.bf16.mxu0 0
    %514 = vmatpush1.bf16.msra.mxu0 0
    %515 = vmatprep.subr.bf16.mxu0 0
    %516 = vmatpush1.bf16.msra.mxu0 0
    %517 = vmatprep.subr.bf16.mxu0 0
    %518 = vmatpush1.bf16.msra.mxu0 0
    %519 = vmatprep.subr.bf16.mxu0 0
    %520 = vmatpush1.bf16.msra.mxu0 0
    %521 = vmatprep.subr.bf16.mxu0 0
    %522 = vmatpush1.bf16.msra.mxu0 0
    %523 = vmatprep.subr.bf16.mxu0 0
    %524 = vmatpush1.bf16.msra.mxu0 0
    %525 = vmatprep.mubr.bf16.mxu0 0
    %526 = vmatmul.mubr.bf16.gmra.mrb[0].mxu0 %v394
    %v527 = vpop.f32.mrb[0].mxu0
    %v528 = vadd.f32 0.0, %v527
    %v529 = vpop.f32.mrb[0].mxu0
    %v530 = vpop.f32.mrb[0].mxu0
    %v531 = vadd.f32 0.0, %v530
    %v532 = vpop.f32.mrb[0].mxu0
    %533 = vmatprep.mubr.bf16.mxu0 0
    %534 = vmatmul.mubr.bf16.gmra.mrb[0].mxu0 %v397
    %v535 = vpop.f32.mrb[0].mxu0
    %v536 = vadd.f32 0.0, %v535
    %v537 = vpop.f32.mrb[0].mxu0
    %v538 = vpop.f32.mrb[0].mxu0
    %v539 = vadd.f32 0.0, %v538
    %v540 = vpop.f32.mrb[0].mxu0
    %541 = vmatprep.mubr.bf16.mxu0 0
    %542 = vmatmul.mubr.bf16.gmra.mrb[0].mxu0 %v400
    %v543 = vpop.f32.mrb[0].mxu0
    %v544 = vadd.f32 0.0, %v543
    %v545 = vpop.f32.mrb[0].mxu0
    %v546 = vpop.f32.mrb[0].mxu0
    %v547 = vadd.f32 0.0, %v546
    %v548 = vpop.f32.mrb[0].mxu0
    %549 = vmatprep.mubr.bf16.mxu0 0
    %550 = vmatmul.mubr.bf16.gmra.mrb[0].mxu0 %v403
    %v551 = vpop.f32.mrb[0].mxu0
    %v552 = vadd.f32 0.0, %v551
    %v553 = vpop.f32.mrb[0].mxu0
    %v554 = vpop.f32.mrb[0].mxu0
    %v555 = vadd.f32 0.0, %v554
    %v556 = vpop.f32.mrb[0].mxu0
    %557 = vmatprep.mubr.bf16.mxu0 0
    %558 = vmatmul.mubr.bf16.gmra.mrb[0].mxu0 %v406
    %v559 = vpop.f32.mrb[0].mxu0
    %v560 = vadd.f32 0.0, %v559
    %v561 = vpop.f32.mrb[0].mxu0
    %v562 = vpop.f32.mrb[0].mxu0
    %v563 = vadd.f32 0.0, %v562
    %v564 = vpop.f32.mrb[0].mxu0
    %565 = vmatprep.mubr.bf16.mxu0 0
    %566 = vmatmul.mubr.bf16.gmra.mrb[0].mxu0 %v409
    %v567 = vpop.f32.mrb[0].mxu0
    %v568 = vadd.f32 0.0, %v567
    %v569 = vpop.f32.mrb[0].mxu0
    %v570 = vpop.f32.mrb[0].mxu0
    %v571 = vadd.f32 0.0, %v570
    %v572 = vpop.f32.mrb[0].mxu0
    %573 = vmatprep.mubr.bf16.mxu0 0
    %574 = vmatmul.mubr.bf16.gmra.mrb[0].mxu0 %v412
    %v575 = vpop.f32.mrb[0].mxu0
    %v576 = vadd.f32 0.0, %v575
    %v577 = vpop.f32.mrb[0].mxu0
    %v578 = vpop.f32.mrb[0].mxu0
    %v579 = vadd.f32 0.0, %v578
    %v580 = vpop.f32.mrb[0].mxu0
    %581 = vmatprep.mubr.bf16.mxu0 0
    %582 = vmatmul.mubr.bf16.gmra.mrb[0].mxu0 %v415
    %v583 = vpop.f32.mrb[0].mxu0
    %v584 = vadd.f32 0.0, %v583
    %v585 = vpop.f32.mrb[0].mxu0
    %v586 = vpop.f32.mrb[0].mxu0
    %v587 = vadd.f32 0.0, %v586
    %v588 = vpop.f32.mrb[0].mxu0
    %589 = vmatprep.mubr.bf16.mxu0 0
    %590 = vmatmul.mubr.bf16.gmra.mrb[0].mxu0 %v418
    %v591 = vpop.f32.mrb[0].mxu0
    %v592 = vadd.f32 0.0, %v591
    %v593 = vpop.f32.mrb[0].mxu0
    %v594 = vpop.f32.mrb[0].mxu0
    %v595 = vadd.f32 0.0, %v594
    %v596 = vpop.f32.mrb[0].mxu0
    %597 = vmatprep.mubr.bf16.mxu0 0
    %598 = vmatmul.mubr.bf16.gmra.mrb[0].mxu0 %v421
    %v599 = vpop.f32.mrb[0].mxu0
    %v600 = vadd.f32 0.0, %v599
    %v601 = vpop.f32.mrb[0].mxu0
    %v602 = vpop.f32.mrb[0].mxu0
    %v603 = vadd.f32 0.0, %v602
    %v604 = vpop.f32.mrb[0].mxu0
    %605 = vmatprep.mubr.bf16.mxu0 0
    %606 = vmatmul.mubr.bf16.gmra.mrb[0].mxu0 %v424
    %v607 = vpop.f32.mrb[0].mxu0
    %v608 = vadd.f32 0.0, %v607
    %v609 = vpop.f32.mrb[0].mxu0
    %v610 = vpop.f32.mrb[0].mxu0
    %v611 = vadd.f32 0.0, %v610
    %v612 = vpop.f32.mrb[0].mxu0
    %613 = vmatprep.mubr.bf16.mxu0 0
    %614 = vmatmul.mubr.bf16.gmra.mrb[0].mxu0 %v427
    %v615 = vpop.f32.mrb[0].mxu0
    %v616 = vadd.f32 0.0, %v615
    %v617 = vpop.f32.mrb[0].mxu0
    %v618 = vpop.f32.mrb[0].mxu0
    %v619 = vadd.f32 0.0, %v618
    %v620 = vpop.f32.mrb[0].mxu0
    %621 = vmatprep.mubr.bf16.mxu0 0
    %622 = vmatmul.mubr.bf16.gmra.mrb[0].mxu0 %v430
    %v623 = vpop.f32.mrb[0].mxu0
    %v624 = vadd.f32 0.0, %v623
    %v625 = vpop.f32.mrb[0].mxu0
    %v626 = vpop.f32.mrb[0].mxu0
    %v627 = vadd.f32 0.0, %v626
    %v628 = vpop.f32.mrb[0].mxu0
    %629 = vmatprep.mubr.bf16.mxu0 0
    %630 = vmatmul.mubr.bf16.gmra.mrb[0].mxu0 %v433
    %v631 = vpop.f32.mrb[0].mxu0
    %v632 = vadd.f32 0.0, %v631
    %v633 = vpop.f32.mrb[0].mxu0
    %v634 = vpop.f32.mrb[0].mxu0
    %v635 = vadd.f32 0.0, %v634
    %v636 = vpop.f32.mrb[0].mxu0
    %637 = vmatprep.mubr.bf16.mxu0 0
    %638 = vmatmul.mubr.bf16.gmra.mrb[0].mxu0 %v436
    %v639 = vpop.f32.mrb[0].mxu0
    %v640 = vadd.f32 0.0, %v639
    %v641 = vpop.f32.mrb[0].mxu0
    %v642 = vpop.f32.mrb[0].mxu0
    %v643 = vadd.f32 0.0, %v642
    %v644 = vpop.f32.mrb[0].mxu0
    %645 = vmatprep.mubr.bf16.mxu0 0
    %646 = vmatmul.mubr.bf16.gmra.mrb[0].mxu0 %v439
    %v647 = vpop.f32.mrb[0].mxu0
    %v648 = vadd.f32 0.0, %v647
    %v649 = vpop.f32.mrb[0].mxu0
    %v650 = vpop.f32.mrb[0].mxu0
    %v651 = vadd.f32 0.0, %v650
    %v652 = vpop.f32.mrb[0].mxu0
    %653 = vmatprep.mubr.bf16.mxu0 0
    %654 = vmatmul.mubr.bf16.gmra.mrb[0].mxu0 %v442
    %v655 = vpop.f32.mrb[0].mxu0
    %v656 = vadd.f32 0.0, %v655
    %v657 = vpop.f32.mrb[0].mxu0
    %v658 = vpop.f32.mrb[0].mxu0
    %v659 = vadd.f32 0.0, %v658
    %v660 = vpop.f32.mrb[0].mxu0
    %661 = vmatprep.mubr.bf16.mxu0 0
    %662 = vmatmul.mubr.bf16.gmra.mrb[0].mxu0 %v445
    %v663 = vpop.f32.mrb[0].mxu0
    %v664 = vadd.f32 0.0, %v663
    %v665 = vpop.f32.mrb[0].mxu0
    %v666 = vpop.f32.mrb[0].mxu0
    %v667 = vadd.f32 0.0, %v666
    %v668 = vpop.f32.mrb[0].mxu0
    %669 = vmatprep.mubr.bf16.mxu0 0
    %670 = vmatmul.mubr.bf16.gmra.mrb[0].mxu0 %v448
    %v671 = vpop.f32.mrb[0].mxu0
    %v672 = vadd.f32 0.0, %v671
    %v673 = vpop.f32.mrb[0].mxu0
    %v674 = vpop.f32.mrb[0].mxu0
    %v675 = vadd.f32 0.0, %v674
    %v676 = vpop.f32.mrb[0].mxu0
    %677 = vmatprep.mubr.bf16.mxu0 0
    %678 = vmatmul.mubr.bf16.gmra.mrb[0].mxu0 %v451
    %v679 = vpop.f32.mrb[0].mxu0
    %v680 = vadd.f32 0.0, %v679
    %v681 = vpop.f32.mrb[0].mxu0
    %v682 = vpop.f32.mrb[0].mxu0
    %v683 = vadd.f32 0.0, %v682
    %v684 = vpop.f32.mrb[0].mxu0
    %685 = vmatprep.mubr.bf16.mxu0 0
    %686 = vmatmul.mubr.bf16.gmra.mrb[0].mxu0 %v454
    %v687 = vpop.f32.mrb[0].mxu0
    %v688 = vadd.f32 0.0, %v687
    %v689 = vpop.f32.mrb[0].mxu0
    %v690 = vpop.f32.mrb[0].mxu0
    %v691 = vadd.f32 0.0, %v690
    %v692 = vpop.f32.mrb[0].mxu0
    %693 = vmatprep.mubr.bf16.mxu0 0
    %694 = vmatmul.mubr.bf16.gmra.mrb[0].mxu0 %v457
    %v695 = vpop.f32.mrb[0].mxu0
    %v696 = vadd.f32 0.0, %v695
    %v697 = vpop.f32.mrb[0].mxu0
    %v698 = vpop.f32.mrb[0].mxu0
    %v699 = vadd.f32 0.0, %v698
    %v700 = vpop.f32.mrb[0].mxu0
    %701 = vmatprep.mubr.bf16.mxu0 0
    %702 = vmatmul.mubr.bf16.gmra.mrb[0].mxu0 %v460
    %v703 = vpop.f32.mrb[0].mxu0
    %v704 = vadd.f32 0.0, %v703
    %v705 = vpop.f32.mrb[0].mxu0
    %v706 = vpop.f32.mrb[0].mxu0
    %v707 = vadd.f32 0.0, %v706
    %v708 = vpop.f32.mrb[0].mxu0
    %709 = vmatprep.mubr.bf16.mxu0 0
    %710 = vmatmul.mubr.bf16.gmra.mrb[0].mxu0 %v463
    %v711 = vpop.f32.mrb[0].mxu0
    %v712 = vadd.f32 0.0, %v711
    %v713 = vpop.f32.mrb[0].mxu0
    %v714 = vpop.f32.mrb[0].mxu0
    %v715 = vadd.f32 0.0, %v714
    %v716 = vpop.f32.mrb[0].mxu0
    %717 = vmatprep.mubr.bf16.mxu0 0
    %718 = vmatmul.mubr.bf16.gmra.mrb[0].mxu0 %v466
    %v719 = vpop.f32.mrb[0].mxu0
    %v720 = vadd.f32 0.0, %v719
    %v721 = vpop.f32.mrb[0].mxu0
    %v722 = vpop.f32.mrb[0].mxu0
    %v723 = vadd.f32 0.0, %v722
    %v724 = vpop.f32.mrb[0].mxu0
    %725 = vmatprep.mubr.bf16.mxu0 0
    %726 = vmatmul.mubr.bf16.gmra.mrb[0].mxu0 %v469
    %v727 = vpop.f32.mrb[0].mxu0
    %v728 = vadd.f32 0.0, %v727
    %v729 = vpop.f32.mrb[0].mxu0
    %v730 = vpop.f32.mrb[0].mxu0
    %v731 = vadd.f32 0.0, %v730
    %v732 = vpop.f32.mrb[0].mxu0
    %733 = vmatprep.mubr.bf16.mxu0 0
    %734 = vmatmul.mubr.bf16.gmra.mrb[0].mxu0 %v472
    %v735 = vpop.f32.mrb[0].mxu0
    %v736 = vadd.f32 0.0, %v735
    %v737 = vpop.f32.mrb[0].mxu0
    %v738 = vpop.f32.mrb[0].mxu0
    %v739 = vadd.f32 0.0, %v738
    %v740 = vpop.f32.mrb[0].mxu0
    %741 = vmatprep.mubr.bf16.mxu0 0
    %742 = vmatmul.mubr.bf16.gmra.mrb[0].mxu0 %v475
    %v743 = vpop.f32.mrb[0].mxu0
    %v744 = vadd.f32 0.0, %v743
    %v745 = vpop.f32.mrb[0].mxu0
    %v746 = vpop.f32.mrb[0].mxu0
    %v747 = vadd.f32 0.0, %v746
    %v748 = vpop.f32.mrb[0].mxu0
    %749 = vmatprep.mubr.bf16.mxu0 0
    %750 = vmatmul.mubr.bf16.gmra.mrb[0].mxu0 %v478
    %v751 = vpop.f32.mrb[0].mxu0
    %v752 = vadd.f32 0.0, %v751
    %v753 = vpop.f32.mrb[0].mxu0
    %v754 = vpop.f32.mrb[0].mxu0
    %v755 = vadd.f32 0.0, %v754
    %v756 = vpop.f32.mrb[0].mxu0
    %757 = vmatprep.mubr.bf16.mxu0 0
    %758 = vmatmul.mubr.bf16.gmra.mrb[0].mxu0 %v481
    %v759 = vpop.f32.mrb[0].mxu0
    %v760 = vadd.f32 0.0, %v759
    %v761 = vpop.f32.mrb[0].mxu0
    %v762 = vpop.f32.mrb[0].mxu0
    %v763 = vadd.f32 0.0, %v762
    %v764 = vpop.f32.mrb[0].mxu0
    %765 = vmatprep.mubr.bf16.mxu0 0
    %766 = vmatmul.mubr.bf16.gmra.mrb[0].mxu0 %v484
    %v767 = vpop.f32.mrb[0].mxu0
    %v768 = vadd.f32 0.0, %v767
    %v769 = vpop.f32.mrb[0].mxu0
    %v770 = vpop.f32.mrb[0].mxu0
    %v771 = vadd.f32 0.0, %v770
    %v772 = vpop.f32.mrb[0].mxu0
    %773 = vmatprep.mubr.bf16.mxu0 0
    %774 = vmatmul.mubr.bf16.gmra.mrb[0].mxu0 %v487
    %v775 = vpop.f32.mrb[0].mxu0
    %v776 = vadd.f32 0.0, %v775
    %v777 = vpop.f32.mrb[0].mxu0
    %v778 = vpop.f32.mrb[0].mxu0
    %v779 = vadd.f32 0.0, %v778
    %v780 = vpop.f32.mrb[0].mxu0
    %781 = vdwg.mxu0
    %v782 = vadd.f32 %v84, %v528
    %v783 = vadd.f32 %v85, %v531
    %v784 = vadd.f32 %v86, %v536
    %v785 = vadd.f32 %v87, %v539
    %v786 = vadd.f32 %v88, %v544
    %v787 = vadd.f32 %v89, %v547
    %v788 = vadd.f32 %v90, %v552
    %v789 = vadd.f32 %v91, %v555
    %v790 = vadd.f32 %v92, %v560
    %v791 = vadd.f32 %v93, %v563
    %v792 = vadd.f32 %v94, %v568
    %v793 = vadd.f32 %v95, %v571
    %v794 = vadd.f32 %v96, %v576
    %v795 = vadd.f32 %v97, %v579
    %v796 = vadd.f32 %v98, %v584
    %v797 = vadd.f32 %v99, %v587
    %v798 = vadd.f32 %v100, %v592
    %v799 = vadd.f32 %v101, %v595
    %v800 = vadd.f32 %v102, %v600
    %v801 = vadd.f32 %v103, %v603
    %v802 = vadd.f32 %v104, %v608
    %v803 = vadd.f32 %v105, %v611
    %v804 = vadd.f32 %v106, %v616
    %v805 = vadd.f32 %v107, %v619
    %v806 = vadd.f32 %v108, %v624
    %v807 = vadd.f32 %v109, %v627
    %v808 = vadd.f32 %v110, %v632
    %v809 = vadd.f32 %v111, %v635
    %v810 = vadd.f32 %v112, %v640
    %v811 = vadd.f32 %v113, %v643
    %v812 = vadd.f32 %v114, %v648
    %v813 = vadd.f32 %v115, %v651
    %v814 = vadd.f32 %v116, %v656
    %v815 = vadd.f32 %v117, %v659
    %v816 = vadd.f32 %v118, %v664
    %v817 = vadd.f32 %v119, %v667
    %v818 = vadd.f32 %v120, %v672
    %v819 = vadd.f32 %v121, %v675
    %v820 = vadd.f32 %v122, %v680
    %v821 = vadd.f32 %v123, %v683
    %v822 = vadd.f32 %v124, %v688
    %v823 = vadd.f32 %v125, %v691
    %v824 = vadd.f32 %v126, %v696
    %v825 = vadd.f32 %v127, %v699
    %v826 = vadd.f32 %v128, %v704
    %v827 = vadd.f32 %v129, %v707
    %v828 = vadd.f32 %v130, %v712
    %v829 = vadd.f32 %v131, %v715
    %v830 = vadd.f32 %v132, %v720
    %v831 = vadd.f32 %v133, %v723
    %v832 = vadd.f32 %v134, %v728
    %v833 = vadd.f32 %v135, %v731
    %v834 = vadd.f32 %v136, %v736
    %v835 = vadd.f32 %v137, %v739
    %v836 = vadd.f32 %v138, %v744
    %v837 = vadd.f32 %v139, %v747
    %v838 = vadd.f32 %v140, %v752
    %v839 = vadd.f32 %v141, %v755
    %v840 = vadd.f32 %v142, %v760
    %v841 = vadd.f32 %v143, %v763
    %v842 = vadd.f32 %v144, %v768
    %v843 = vadd.f32 %v145, %v771
    %v844 = vadd.f32 %v146, %v776
    %v845 = vadd.f32 %v147, %v779
    %vm846 = vcmask 523264
    %847 = vst.msk [vmem:[#allocation2] sm:$0xff] %vm846, %v782
    %848 = vst.msk [vmem:[#allocation2 + $0x8] sm:$0xff] %vm846, %v783
    %849 = vst.msk [vmem:[#allocation2 + $0x10] sm:$0xff] %vm846, %v784
    %850 = vst.msk [vmem:[#allocation2 + $0x18] sm:$0xff] %vm846, %v785
    %851 = vst.msk [vmem:[#allocation2 + $0x20] sm:$0xff] %vm846, %v786
    %852 = vst.msk [vmem:[#allocation2 + $0x28] sm:$0xff] %vm846, %v787
    %853 = vst.msk [vmem:[#allocation2 + $0x30] sm:$0xff] %vm846, %v788
    %854 = vst.msk [vmem:[#allocation2 + $0x38] sm:$0xff] %vm846, %v789
    %855 = vst.msk [vmem:[#allocation2 + $0x40] sm:$0xff] %vm846, %v790
    %856 = vst.msk [vmem:[#allocation2 + $0x48] sm:$0xff] %vm846, %v791
    %857 = vst.msk [vmem:[#allocation2 + $0x50] sm:$0xff] %vm846, %v792
    %858 = vst.msk [vmem:[#allocation2 + $0x58] sm:$0xff] %vm846, %v793
    %859 = vst.msk [vmem:[#allocation2 + $0x60] sm:$0xff] %vm846, %v794
    %860 = vst.msk [vmem:[#allocation2 + $0x68] sm:$0xff] %vm846, %v795
    %861 = vst.msk [vmem:[#allocation2 + $0x70] sm:$0xff] %vm846, %v796
    %862 = vst.msk [vmem:[#allocation2 + $0x78] sm:$0xff] %vm846, %v797
    %863 = vst.msk [vmem:[#allocation2 + $0x80] sm:$0xff] %vm846, %v798
    %864 = vst.msk [vmem:[#allocation2 + $0x88] sm:$0xff] %vm846, %v799
    %865 = vst.msk [vmem:[#allocation2 + $0x90] sm:$0xff] %vm846, %v800
    %866 = vst.msk [vmem:[#allocation2 + $0x98] sm:$0xff] %vm846, %v801
    %867 = vst.msk [vmem:[#allocation2 + $0xa0] sm:$0xff] %vm846, %v802
    %868 = vst.msk [vmem:[#allocation2 + $0xa8] sm:$0xff] %vm846, %v803
    %869 = vst.msk [vmem:[#allocation2 + $0xb0] sm:$0xff] %vm846, %v804
    %870 = vst.msk [vmem:[#allocation2 + $0xb8] sm:$0xff] %vm846, %v805
    %871 = vst.msk [vmem:[#allocation2 + $0xc0] sm:$0xff] %vm846, %v806
    %872 = vst.msk [vmem:[#allocation2 + $0xc8] sm:$0xff] %vm846, %v807
    %873 = vst.msk [vmem:[#allocation2 + $0xd0] sm:$0xff] %vm846, %v808
    %874 = vst.msk [vmem:[#allocation2 + $0xd8] sm:$0xff] %vm846, %v809
    %875 = vst.msk [vmem:[#allocation2 + $0xe0] sm:$0xff] %vm846, %v810
    %876 = vst.msk [vmem:[#allocation2 + $0xe8] sm:$0xff] %vm846, %v811
    %877 = vst.msk [vmem:[#allocation2 + $0xf0] sm:$0xff] %vm846, %v812
    %878 = vst.msk [vmem:[#allocation2 + $0xf8] sm:$0xff] %vm846, %v813
    %879 = vst.msk [vmem:[#allocation2 + $0x100] sm:$0xff] %vm846, %v814
    %880 = vst.msk [vmem:[#allocation2 + $0x108] sm:$0xff] %vm846, %v815
    %881 = vst.msk [vmem:[#allocation2 + $0x110] sm:$0xff] %vm846, %v816
    %882 = vst.msk [vmem:[#allocation2 + $0x118] sm:$0xff] %vm846, %v817
    %883 = vst.msk [vmem:[#allocation2 + $0x120] sm:$0xff] %vm846, %v818
    %884 = vst.msk [vmem:[#allocation2 + $0x128] sm:$0xff] %vm846, %v819
    %885 = vst.msk [vmem:[#allocation2 + $0x130] sm:$0xff] %vm846, %v820
    %886 = vst.msk [vmem:[#allocation2 + $0x138] sm:$0xff] %vm846, %v821
    %887 = vst.msk [vmem:[#allocation2 + $0x140] sm:$0xff] %vm846, %v822
    %888 = vst.msk [vmem:[#allocation2 + $0x148] sm:$0xff] %vm846, %v823
    %889 = vst.msk [vmem:[#allocation2 + $0x150] sm:$0xff] %vm846, %v824
    %890 = vst.msk [vmem:[#allocation2 + $0x158] sm:$0xff] %vm846, %v825
    %891 = vst.msk [vmem:[#allocation2 + $0x160] sm:$0xff] %vm846, %v826
    %892 = vst.msk [vmem:[#allocation2 + $0x168] sm:$0xff] %vm846, %v827
    %893 = vst.msk [vmem:[#allocation2 + $0x170] sm:$0xff] %vm846, %v828
    %894 = vst.msk [vmem:[#allocation2 + $0x178] sm:$0xff] %vm846, %v829
    %895 = vst.msk [vmem:[#allocation2 + $0x180] sm:$0xff] %vm846, %v830
    %896 = vst.msk [vmem:[#allocation2 + $0x188] sm:$0xff] %vm846, %v831
    %897 = vst.msk [vmem:[#allocation2 + $0x190] sm:$0xff] %vm846, %v832
    %898 = vst.msk [vmem:[#allocation2 + $0x198] sm:$0xff] %vm846, %v833
    %899 = vst.msk [vmem:[#allocation2 + $0x1a0] sm:$0xff] %vm846, %v834
    %900 = vst.msk [vmem:[#allocation2 + $0x1a8] sm:$0xff] %vm846, %v835
    %901 = vst.msk [vmem:[#allocation2 + $0x1b0] sm:$0xff] %vm846, %v836
    %902 = vst.msk [vmem:[#allocation2 + $0x1b8] sm:$0xff] %vm846, %v837
    %903 = vst.msk [vmem:[#allocation2 + $0x1c0] sm:$0xff] %vm846, %v838
    %904 = vst.msk [vmem:[#allocation2 + $0x1c8] sm:$0xff] %vm846, %v839
    %905 = vst.msk [vmem:[#allocation2 + $0x1d0] sm:$0xff] %vm846, %v840
    %906 = vst.msk [vmem:[#allocation2 + $0x1d8] sm:$0xff] %vm846, %v841
    %907 = vst.msk [vmem:[#allocation2 + $0x1e0] sm:$0xff] %vm846, %v842
    %908 = vst.msk [vmem:[#allocation2 + $0x1e8] sm:$0xff] %vm846, %v843
    %909 = vst.msk [vmem:[#allocation2 + $0x1f0] sm:$0xff] %vm846, %v844
    %910 = vst.msk [vmem:[#allocation2 + $0x1f8] sm:$0xff] %vm846, %v845
    // Predicated region
    $region14: #{tpu_custom_call.1} parent=1 // pred_check
      %p911 = pneg %p15
    $region15: #{tpu_custom_call.1} parent=1 // pred_check_branch
      %913 = sbr.rel (%p911) target = $region17
    $region16: #{tpu_custom_call.1} parent=1 // pred_region
      %v914 = vld [vmem:[#allocation2] sm:$0xff]
      %v915 = vld [vmem:[#allocation2 + $0x8] sm:$0xff]
      %v916 = vld [vmem:[#allocation2 + $0x10] sm:$0xff]
      %v917 = vld [vmem:[#allocation2 + $0x18] sm:$0xff]
      %v918 = vld [vmem:[#allocation2 + $0x20] sm:$0xff]
      %v919 = vld [vmem:[#allocation2 + $0x28] sm:$0xff]
      %v920 = vld [vmem:[#allocation2 + $0x30] sm:$0xff]
      %v921 = vld [vmem:[#allocation2 + $0x38] sm:$0xff]
      %v922 = vld [vmem:[#allocation2 + $0x40] sm:$0xff]
      %v923 = vld [vmem:[#allocation2 + $0x48] sm:$0xff]
      %v924 = vld [vmem:[#allocation2 + $0x50] sm:$0xff]
      %v925 = vld [vmem:[#allocation2 + $0x58] sm:$0xff]
      %v926 = vld [vmem:[#allocation2 + $0x60] sm:$0xff]
      %v927 = vld [vmem:[#allocation2 + $0x68] sm:$0xff]
      %v928 = vld [vmem:[#allocation2 + $0x70] sm:$0xff]
      %v929 = vld [vmem:[#allocation2 + $0x78] sm:$0xff]
      %v930 = vld [vmem:[#allocation2 + $0x80] sm:$0xff]
      %v931 = vld [vmem:[#allocation2 + $0x88] sm:$0xff]
      %v932 = vld [vmem:[#allocation2 + $0x90] sm:$0xff]
      %v933 = vld [vmem:[#allocation2 + $0x98] sm:$0xff]
      %v934 = vld [vmem:[#allocation2 + $0xa0] sm:$0xff]
      %v935 = vld [vmem:[#allocation2 + $0xa8] sm:$0xff]
      %v936 = vld [vmem:[#allocation2 + $0xb0] sm:$0xff]
      %v937 = vld [vmem:[#allocation2 + $0xb8] sm:$0xff]
      %v938 = vld [vmem:[#allocation2 + $0xc0] sm:$0xff]
      %v939 = vld [vmem:[#allocation2 + $0xc8] sm:$0xff]
      %v940 = vld [vmem:[#allocation2 + $0xd0] sm:$0xff]
      %v941 = vld [vmem:[#allocation2 + $0xd8] sm:$0xff]
      %v942 = vld [vmem:[#allocation2 + $0xe0] sm:$0xff]
      %v943 = vld [vmem:[#allocation2 + $0xe8] sm:$0xff]
      %v944 = vld [vmem:[#allocation2 + $0xf0] sm:$0xff]
      %v945 = vld [vmem:[#allocation2 + $0xf8] sm:$0xff]
      %v946 = vld [vmem:[#allocation2 + $0x100] sm:$0xff]
      %v947 = vld [vmem:[#allocation2 + $0x108] sm:$0xff]
      %v948 = vld [vmem:[#allocation2 + $0x110] sm:$0xff]
      %v949 = vld [vmem:[#allocation2 + $0x118] sm:$0xff]
      %v950 = vld [vmem:[#allocation2 + $0x120] sm:$0xff]
      %v951 = vld [vmem:[#allocation2 + $0x128] sm:$0xff]
      %v952 = vld [vmem:[#allocation2 + $0x130] sm:$0xff]
      %v953 = vld [vmem:[#allocation2 + $0x138] sm:$0xff]
      %v954 = vld [vmem:[#allocation2 + $0x140] sm:$0xff]
      %v955 = vld [vmem:[#allocation2 + $0x148] sm:$0xff]
      %v956 = vld [vmem:[#allocation2 + $0x150] sm:$0xff]
      %v957 = vld [vmem:[#allocation2 + $0x158] sm:$0xff]
      %v958 = vld [vmem:[#allocation2 + $0x160] sm:$0xff]
      %v959 = vld [vmem:[#allocation2 + $0x168] sm:$0xff]
      %v960 = vld [vmem:[#allocation2 + $0x170] sm:$0xff]
      %v961 = vld [vmem:[#allocation2 + $0x178] sm:$0xff]
      %v962 = vld [vmem:[#allocation2 + $0x180] sm:$0xff]
      %v963 = vld [vmem:[#allocation2 + $0x188] sm:$0xff]
      %v964 = vld [vmem:[#allocation2 + $0x190] sm:$0xff]
      %v965 = vld [vmem:[#allocation2 + $0x198] sm:$0xff]
      %v966 = vld [vmem:[#allocation2 + $0x1a0] sm:$0xff]
      %v967 = vld [vmem:[#allocation2 + $0x1a8] sm:$0xff]
      %v968 = vld [vmem:[#allocation2 + $0x1b0] sm:$0xff]
      %v969 = vld [vmem:[#allocation2 + $0x1b8] sm:$0xff]
      %v970 = vld [vmem:[#allocation2 + $0x1c0] sm:$0xff]
      %v971 = vld [vmem:[#allocation2 + $0x1c8] sm:$0xff]
      %v972 = vld [vmem:[#allocation2 + $0x1d0] sm:$0xff]
      %v973 = vld [vmem:[#allocation2 + $0x1d8] sm:$0xff]
      %v974 = vld [vmem:[#allocation2 + $0x1e0] sm:$0xff]
      %v975 = vld [vmem:[#allocation2 + $0x1e8] sm:$0xff]
      %v976 = vld [vmem:[#allocation2 + $0x1f0] sm:$0xff]
      %v977 = vld [vmem:[#allocation2 + $0x1f8] sm:$0xff]
      %978 = vst.msk [vmem:[%s2] sm:$0xff] %vm846, %v914
      %979 = vst.msk [vmem:[%s2 + $0x8] sm:$0xff] %vm846, %v915
      %980 = vst.msk [vmem:[%s2 + $0x10] sm:$0xff] %vm846, %v916
      %981 = vst.msk [vmem:[%s2 + $0x18] sm:$0xff] %vm846, %v917
      %982 = vst.msk [vmem:[%s2 + $0x20] sm:$0xff] %vm846, %v918
      %983 = vst.msk [vmem:[%s2 + $0x28] sm:$0xff] %vm846, %v919
      %984 = vst.msk [vmem:[%s2 + $0x30] sm:$0xff] %vm846, %v920
      %985 = vst.msk [vmem:[%s2 + $0x38] sm:$0xff] %vm846, %v921
      %986 = vst.msk [vmem:[%s2 + $0x40] sm:$0xff] %vm846, %v922
      %987 = vst.msk [vmem:[%s2 + $0x48] sm:$0xff] %vm846, %v923
      %988 = vst.msk [vmem:[%s2 + $0x50] sm:$0xff] %vm846, %v924
      %989 = vst.msk [vmem:[%s2 + $0x58] sm:$0xff] %vm846, %v925
      %990 = vst.msk [vmem:[%s2 + $0x60] sm:$0xff] %vm846, %v926
      %991 = vst.msk [vmem:[%s2 + $0x68] sm:$0xff] %vm846, %v927
      %992 = vst.msk [vmem:[%s2 + $0x70] sm:$0xff] %vm846, %v928
      %993 = vst.msk [vmem:[%s2 + $0x78] sm:$0xff] %vm846, %v929
      %994 = vst.msk [vmem:[%s2 + $0x80] sm:$0xff] %vm846, %v930
      %995 = vst.msk [vmem:[%s2 + $0x88] sm:$0xff] %vm846, %v931
      %996 = vst.msk [vmem:[%s2 + $0x90] sm:$0xff] %vm846, %v932
      %997 = vst.msk [vmem:[%s2 + $0x98] sm:$0xff] %vm846, %v933
      %998 = vst.msk [vmem:[%s2 + $0xa0] sm:$0xff] %vm846, %v934
      %999 = vst.msk [vmem:[%s2 + $0xa8] sm:$0xff] %vm846, %v935
      %1000 = vst.msk [vmem:[%s2 + $0xb0] sm:$0xff] %vm846, %v936
      %1001 = vst.msk [vmem:[%s2 + $0xb8] sm:$0xff] %vm846, %v937
      %1002 = vst.msk [vmem:[%s2 + $0xc0] sm:$0xff] %vm846, %v938
      %1003 = vst.msk [vmem:[%s2 + $0xc8] sm:$0xff] %vm846, %v939
      %1004 = vst.msk [vmem:[%s2 + $0xd0] sm:$0xff] %vm846, %v940
      %1005 = vst.msk [vmem:[%s2 + $0xd8] sm:$0xff] %vm846, %v941
      %1006 = vst.msk [vmem:[%s2 + $0xe0] sm:$0xff] %vm846, %v942
      %1007 = vst.msk [vmem:[%s2 + $0xe8] sm:$0xff] %vm846, %v943
      %1008 = vst.msk [vmem:[%s2 + $0xf0] sm:$0xff] %vm846, %v944
      %1009 = vst.msk [vmem:[%s2 + $0xf8] sm:$0xff] %vm846, %v945
      %1010 = vst.msk [vmem:[%s2 + $0x100] sm:$0xff] %vm846, %v946
      %1011 = vst.msk [vmem:[%s2 + $0x108] sm:$0xff] %vm846, %v947
      %1012 = vst.msk [vmem:[%s2 + $0x110] sm:$0xff] %vm846, %v948
      %1013 = vst.msk [vmem:[%s2 + $0x118] sm:$0xff] %vm846, %v949
      %1014 = vst.msk [vmem:[%s2 + $0x120] sm:$0xff] %vm846, %v950
      %1015 = vst.msk [vmem:[%s2 + $0x128] sm:$0xff] %vm846, %v951
      %1016 = vst.msk [vmem:[%s2 + $0x130] sm:$0xff] %vm846, %v952
      %1017 = vst.msk [vmem:[%s2 + $0x138] sm:$0xff] %vm846, %v953
      %1018 = vst.msk [vmem:[%s2 + $0x140] sm:$0xff] %vm846, %v954
      %1019 = vst.msk [vmem:[%s2 + $0x148] sm:$0xff] %vm846, %v955
      %1020 = vst.msk [vmem:[%s2 + $0x150] sm:$0xff] %vm846, %v956
      %1021 = vst.msk [vmem:[%s2 + $0x158] sm:$0xff] %vm846, %v957
      %1022 = vst.msk [vmem:[%s2 + $0x160] sm:$0xff] %vm846, %v958
      %1023 = vst.msk [vmem:[%s2 + $0x168] sm:$0xff] %vm846, %v959
      %1024 = vst.msk [vmem:[%s2 + $0x170] sm:$0xff] %vm846, %v960
      %1025 = vst.msk [vmem:[%s2 + $0x178] sm:$0xff] %vm846, %v961
      %1026 = vst.msk [vmem:[%s2 + $0x180] sm:$0xff] %vm846, %v962
      %1027 = vst.msk [vmem:[%s2 + $0x188] sm:$0xff] %vm846, %v963
      %1028 = vst.msk [vmem:[%s2 + $0x190] sm:$0xff] %vm846, %v964
      %1029 = vst.msk [vmem:[%s2 + $0x198] sm:$0xff] %vm846, %v965
      %1030 = vst.msk [vmem:[%s2 + $0x1a0] sm:$0xff] %vm846, %v966
      %1031 = vst.msk [vmem:[%s2 + $0x1a8] sm:$0xff] %vm846, %v967
      %1032 = vst.msk [vmem:[%s2 + $0x1b0] sm:$0xff] %vm846, %v968
      %1033 = vst.msk [vmem:[%s2 + $0x1b8] sm:$0xff] %vm846, %v969
      %1034 = vst.msk [vmem:[%s2 + $0x1c0] sm:$0xff] %vm846, %v970
      %1035 = vst.msk [vmem:[%s2 + $0x1c8] sm:$0xff] %vm846, %v971
      %1036 = vst.msk [vmem:[%s2 + $0x1d0] sm:$0xff] %vm846, %v972
      %1037 = vst.msk [vmem:[%s2 + $0x1d8] sm:$0xff] %vm846, %v973
      %1038 = vst.msk [vmem:[%s2 + $0x1e0] sm:$0xff] %vm846, %v974
      %1039 = vst.msk [vmem:[%s2 + $0x1e8] sm:$0xff] %vm846, %v975
      %1040 = vst.msk [vmem:[%s2 + $0x1f0] sm:$0xff] %vm846, %v976
      %1041 = vst.msk [vmem:[%s2 + $0x1f8] sm:$0xff] %vm846, %v977
      %v1042 = vsel %vm846, %v914, 0.0
      %v1043 = vsel %vm846, %v915, 0.0
      %v1044 = vadd.f32 %v1042, %v1043
      %v1045 = vsel %vm846, %v916, 0.0
      %v1046 = vadd.f32 %v1044, %v1045
      %v1047 = vsel %vm846, %v917, 0.0
      %v1048 = vadd.f32 %v1046, %v1047
      %v1049 = vsel %vm846, %v918, 0.0
      %v1050 = vadd.f32 %v1048, %v1049
      %v1051 = vsel %vm846, %v919, 0.0
      %v1052 = vadd.f32 %v1050, %v1051
      %v1053 = vsel %vm846, %v920, 0.0
      %v1054 = vadd.f32 %v1052, %v1053
      %v1055 = vsel %vm846, %v921, 0.0
      %v1056 = vadd.f32 %v1054, %v1055
      %v1057 = vsel %vm846, %v922, 0.0
      %v1058 = vadd.f32 %v1056, %v1057
      %v1059 = vsel %vm846, %v923, 0.0
      %v1060 = vadd.f32 %v1058, %v1059
      %v1061 = vsel %vm846, %v924, 0.0
      %v1062 = vadd.f32 %v1060, %v1061
      %v1063 = vsel %vm846, %v925, 0.0
      %v1064 = vadd.f32 %v1062, %v1063
      %v1065 = vsel %vm846, %v926, 0.0
      %v1066 = vadd.f32 %v1064, %v1065
      %v1067 = vsel %vm846, %v927, 0.0
      %v1068 = vadd.f32 %v1066, %v1067
      %v1069 = vsel %vm846, %v928, 0.0
      %v1070 = vadd.f32 %v1068, %v1069
      %v1071 = vsel %vm846, %v929, 0.0
      %v1072 = vadd.f32 %v1070, %v1071
      %v1073 = vsel %vm846, %v930, 0.0
      %v1074 = vadd.f32 %v1072, %v1073
      %v1075 = vsel %vm846, %v931, 0.0
      %v1076 = vadd.f32 %v1074, %v1075
      %v1077 = vsel %vm846, %v932, 0.0
      %v1078 = vadd.f32 %v1076, %v1077
      %v1079 = vsel %vm846, %v933, 0.0
      %v1080 = vadd.f32 %v1078, %v1079
      %v1081 = vsel %vm846, %v934, 0.0
      %v1082 = vadd.f32 %v1080, %v1081
      %v1083 = vsel %vm846, %v935, 0.0
      %v1084 = vadd.f32 %v1082, %v1083
      %v1085 = vsel %vm846, %v936, 0.0
      %v1086 = vadd.f32 %v1084, %v1085
      %v1087 = vsel %vm846, %v937, 0.0
      %v1088 = vadd.f32 %v1086, %v1087
      %v1089 = vsel %vm846, %v938, 0.0
      %v1090 = vadd.f32 %v1088, %v1089
      %v1091 = vsel %vm846, %v939, 0.0
      %v1092 = vadd.f32 %v1090, %v1091
      %v1093 = vsel %vm846, %v940, 0.0
      %v1094 = vadd.f32 %v1092, %v1093
      %v1095 = vsel %vm846, %v941, 0.0
      %v1096 = vadd.f32 %v1094, %v1095
      %v1097 = vsel %vm846, %v942, 0.0
      %v1098 = vadd.f32 %v1096, %v1097
      %v1099 = vsel %vm846, %v943, 0.0
      %v1100 = vadd.f32 %v1098, %v1099
      %v1101 = vsel %vm846, %v944, 0.0
      %v1102 = vadd.f32 %v1100, %v1101
      %v1103 = vsel %vm846, %v945, 0.0
      %v1104 = vadd.f32 %v1102, %v1103
      %v1105 = vsel %vm846, %v946, 0.0
      %v1106 = vadd.f32 %v1104, %v1105
      %v1107 = vsel %vm846, %v947, 0.0
      %v1108 = vadd.f32 %v1106, %v1107
      %v1109 = vsel %vm846, %v948, 0.0
      %v1110 = vadd.f32 %v1108, %v1109
      %v1111 = vsel %vm846, %v949, 0.0
      %v1112 = vadd.f32 %v1110, %v1111
      %v1113 = vsel %vm846, %v950, 0.0
      %v1114 = vadd.f32 %v1112, %v1113
      %v1115 = vsel %vm846, %v951, 0.0
      %v1116 = vadd.f32 %v1114, %v1115
      %v1117 = vsel %vm846, %v952, 0.0
      %v1118 = vadd.f32 %v1116, %v1117
      %v1119 = vsel %vm846, %v953, 0.0
      %v1120 = vadd.f32 %v1118, %v1119
      %v1121 = vsel %vm846, %v954, 0.0
      %v1122 = vadd.f32 %v1120, %v1121
      %v1123 = vsel %vm846, %v955, 0.0
      %v1124 = vadd.f32 %v1122, %v1123
      %v1125 = vsel %vm846, %v956, 0.0
      %v1126 = vadd.f32 %v1124, %v1125
      %v1127 = vsel %vm846, %v957, 0.0
      %v1128 = vadd.f32 %v1126, %v1127
      %v1129 = vsel %vm846, %v958, 0.0
      %v1130 = vadd.f32 %v1128, %v1129
      %v1131 = vsel %vm846, %v959, 0.0
      %v1132 = vadd.f32 %v1130, %v1131
      %v1133 = vsel %vm846, %v960, 0.0
      %v1134 = vadd.f32 %v1132, %v1133
      %v1135 = vsel %vm846, %v961, 0.0
      %v1136 = vadd.f32 %v1134, %v1135
      %v1137 = vsel %vm846, %v962, 0.0
      %v1138 = vadd.f32 %v1136, %v1137
      %v1139 = vsel %vm846, %v963, 0.0
      %v1140 = vadd.f32 %v1138, %v1139
      %v1141 = vsel %vm846, %v964, 0.0
      %v1142 = vadd.f32 %v1140, %v1141
      %v1143 = vsel %vm846, %v965, 0.0
      %v1144 = vadd.f32 %v1142, %v1143
      %v1145 = vsel %vm846, %v966, 0.0
      %v1146 = vadd.f32 %v1144, %v1145
      %v1147 = vsel %vm846, %v967, 0.0
      %v1148 = vadd.f32 %v1146, %v1147
      %v1149 = vsel %vm846, %v968, 0.0
      %v1150 = vadd.f32 %v1148, %v1149
      %v1151 = vsel %vm846, %v969, 0.0
      %v1152 = vadd.f32 %v1150, %v1151
      %v1153 = vsel %vm846, %v970, 0.0
      %v1154 = vadd.f32 %v1152, %v1153
      %v1155 = vsel %vm846, %v971, 0.0
      %v1156 = vadd.f32 %v1154, %v1155
      %v1157 = vsel %vm846, %v972, 0.0
      %v1158 = vadd.f32 %v1156, %v1157
      %v1159 = vsel %vm846, %v973, 0.0
      %v1160 = vadd.f32 %v1158, %v1159
      %v1161 = vsel %vm846, %v974, 0.0
      %v1162 = vadd.f32 %v1160, %v1161
      %v1163 = vsel %vm846, %v975, 0.0
      %v1164 = vadd.f32 %v1162, %v1163
      %v1165 = vsel %vm846, %v976, 0.0
      %v1166 = vadd.f32 %v1164, %v1165
      %v1167 = vsel %vm846, %v977, 0.0
      %v1168 = vadd.f32 %v1166, %v1167
      %v1169 = vrot.slane %v1168, 4
      %v1170 = vadd.f32 %v1168, %v1169
      %v1171 = vrot.slane %v1170, 2
      %v1172 = vadd.f32 %v1170, %v1171
      %v1173 = vrot.slane %v1172, 1
      %v1174 = vadd.f32 %v1172, %v1173
      %v1175 = vmul.f32 %v914, %v914
      %v1176 = vmul.f32 %v915, %v915
      %v1177 = vmul.f32 %v916, %v916
      %v1178 = vmul.f32 %v917, %v917
      %v1179 = vmul.f32 %v918, %v918
      %v1180 = vmul.f32 %v919, %v919
      %v1181 = vmul.f32 %v920, %v920
      %v1182 = vmul.f32 %v921, %v921
      %v1183 = vmul.f32 %v922, %v922
      %v1184 = vmul.f32 %v923, %v923
      %v1185 = vmul.f32 %v924, %v924
      %v1186 = vmul.f32 %v925, %v925
      %v1187 = vmul.f32 %v926, %v926
      %v1188 = vmul.f32 %v927, %v927
      %v1189 = vmul.f32 %v928, %v928
      %v1190 = vmul.f32 %v929, %v929
      %v1191 = vmul.f32 %v930, %v930
      %v1192 = vmul.f32 %v931, %v931
      %v1193 = vmul.f32 %v932, %v932
      %v1194 = vmul.f32 %v933, %v933
      %v1195 = vmul.f32 %v934, %v934
      %v1196 = vmul.f32 %v935, %v935
      %v1197 = vmul.f32 %v936, %v936
      %v1198 = vmul.f32 %v937, %v937
      %v1199 = vmul.f32 %v938, %v938
      %v1200 = vmul.f32 %v939, %v939
      %v1201 = vmul.f32 %v940, %v940
      %v1202 = vmul.f32 %v941, %v941
      %v1203 = vmul.f32 %v942, %v942
      %v1204 = vmul.f32 %v943, %v943
      %v1205 = vmul.f32 %v944, %v944
      %v1206 = vmul.f32 %v945, %v945
      %v1207 = vmul.f32 %v946, %v946
      %v1208 = vmul.f32 %v947, %v947
      %v1209 = vmul.f32 %v948, %v948
      %v1210 = vmul.f32 %v949, %v949
      %v1211 = vmul.f32 %v950, %v950
      %v1212 = vmul.f32 %v951, %v951
      %v1213 = vmul.f32 %v952, %v952
      %v1214 = vmul.f32 %v953, %v953
      %v1215 = vmul.f32 %v954, %v954
      %v1216 = vmul.f32 %v955, %v955
      %v1217 = vmul.f32 %v956, %v956
      %v1218 = vmul.f32 %v957, %v957
      %v1219 = vmul.f32 %v958, %v958
      %v1220 = vmul.f32 %v959, %v959
      %v1221 = vmul.f32 %v960, %v960
      %v1222 = vmul.f32 %v961, %v961
      %v1223 = vmul.f32 %v962, %v962
      %v1224 = vmul.f32 %v963, %v963
      %v1225 = vmul.f32 %v964, %v964
      %v1226 = vmul.f32 %v965, %v965
      %v1227 = vmul.f32 %v966, %v966
      %v1228 = vmul.f32 %v967, %v967
      %v1229 = vmul.f32 %v968, %v968
      %v1230 = vmul.f32 %v969, %v969
      %v1231 = vmul.f32 %v970, %v970
      %v1232 = vmul.f32 %v971, %v971
      %v1233 = vmul.f32 %v972, %v972
      %v1234 = vmul.f32 %v973, %v973
      %v1235 = vmul.f32 %v974, %v974
      %v1236 = vmul.f32 %v975, %v975
      %v1237 = vmul.f32 %v976, %v976
      %v1238 = vmul.f32 %v977, %v977
      %v1239 = vsel %vm846, %v1175, 0.0
      %v1240 = vsel %vm846, %v1176, 0.0
      %v1241 = vadd.f32 %v1239, %v1240
      %v1242 = vsel %vm846, %v1177, 0.0
      %v1243 = vadd.f32 %v1241, %v1242
      %v1244 = vsel %vm846, %v1178, 0.0
      %v1245 = vadd.f32 %v1243, %v1244
      %v1246 = vsel %vm846, %v1179, 0.0
      %v1247 = vadd.f32 %v1245, %v1246
      %v1248 = vsel %vm846, %v1180, 0.0
      %v1249 = vadd.f32 %v1247, %v1248
      %v1250 = vsel %vm846, %v1181, 0.0
      %v1251 = vadd.f32 %v1249, %v1250
      %v1252 = vsel %vm846, %v1182, 0.0
      %v1253 = vadd.f32 %v1251, %v1252
      %v1254 = vsel %vm846, %v1183, 0.0
      %v1255 = vadd.f32 %v1253, %v1254
      %v1256 = vsel %vm846, %v1184, 0.0
      %v1257 = vadd.f32 %v1255, %v1256
      %v1258 = vsel %vm846, %v1185, 0.0
      %v1259 = vadd.f32 %v1257, %v1258
      %v1260 = vsel %vm846, %v1186, 0.0
      %v1261 = vadd.f32 %v1259, %v1260
      %v1262 = vsel %vm846, %v1187, 0.0
      %v1263 = vadd.f32 %v1261, %v1262
      %v1264 = vsel %vm846, %v1188, 0.0
      %v1265 = vadd.f32 %v1263, %v1264
      %v1266 = vsel %vm846, %v1189, 0.0
      %v1267 = vadd.f32 %v1265, %v1266
      %v1268 = vsel %vm846, %v1190, 0.0
      %v1269 = vadd.f32 %v1267, %v1268
      %v1270 = vsel %vm846, %v1191, 0.0
      %v1271 = vadd.f32 %v1269, %v1270
      %v1272 = vsel %vm846, %v1192, 0.0
      %v1273 = vadd.f32 %v1271, %v1272
      %v1274 = vsel %vm846, %v1193, 0.0
      %v1275 = vadd.f32 %v1273, %v1274
      %v1276 = vsel %vm846, %v1194, 0.0
      %v1277 = vadd.f32 %v1275, %v1276
      %v1278 = vsel %vm846, %v1195, 0.0
      %v1279 = vadd.f32 %v1277, %v1278
      %v1280 = vsel %vm846, %v1196, 0.0
      %v1281 = vadd.f32 %v1279, %v1280
      %v1282 = vsel %vm846, %v1197, 0.0
      %v1283 = vadd.f32 %v1281, %v1282
      %v1284 = vsel %vm846, %v1198, 0.0
      %v1285 = vadd.f32 %v1283, %v1284
      %v1286 = vsel %vm846, %v1199, 0.0
      %v1287 = vadd.f32 %v1285, %v1286
      %v1288 = vsel %vm846, %v1200, 0.0
      %v1289 = vadd.f32 %v1287, %v1288
      %v1290 = vsel %vm846, %v1201, 0.0
      %v1291 = vadd.f32 %v1289, %v1290
      %v1292 = vsel %vm846, %v1202, 0.0
      %v1293 = vadd.f32 %v1291, %v1292
      %v1294 = vsel %vm846, %v1203, 0.0
      %v1295 = vadd.f32 %v1293, %v1294
      %v1296 = vsel %vm846, %v1204, 0.0
      %v1297 = vadd.f32 %v1295, %v1296
      %v1298 = vsel %vm846, %v1205, 0.0
      %v1299 = vadd.f32 %v1297, %v1298
      %v1300 = vsel %vm846, %v1206, 0.0
      %v1301 = vadd.f32 %v1299, %v1300
      %v1302 = vsel %vm846, %v1207, 0.0
      %v1303 = vadd.f32 %v1301, %v1302
      %v1304 = vsel %vm846, %v1208, 0.0
      %v1305 = vadd.f32 %v1303, %v1304
      %v1306 = vsel %vm846, %v1209, 0.0
      %v1307 = vadd.f32 %v1305, %v1306
      %v1308 = vsel %vm846, %v1210, 0.0
      %v1309 = vadd.f32 %v1307, %v1308
      %v1310 = vsel %vm846, %v1211, 0.0
      %v1311 = vadd.f32 %v1309, %v1310
      %v1312 = vsel %vm846, %v1212, 0.0
      %v1313 = vadd.f32 %v1311, %v1312
      %v1314 = vsel %vm846, %v1213, 0.0
      %v1315 = vadd.f32 %v1313, %v1314
      %v1316 = vsel %vm846, %v1214, 0.0
      %v1317 = vadd.f32 %v1315, %v1316
      %v1318 = vsel %vm846, %v1215, 0.0
      %v1319 = vadd.f32 %v1317, %v1318
      %v1320 = vsel %vm846, %v1216, 0.0
      %v1321 = vadd.f32 %v1319, %v1320
      %v1322 = vsel %vm846, %v1217, 0.0
      %v1323 = vadd.f32 %v1321, %v1322
      %v1324 = vsel %vm846, %v1218, 0.0
      %v1325 = vadd.f32 %v1323, %v1324
      %v1326 = vsel %vm846, %v1219, 0.0
      %v1327 = vadd.f32 %v1325, %v1326
      %v1328 = vsel %vm846, %v1220, 0.0
      %v1329 = vadd.f32 %v1327, %v1328
      %v1330 = vsel %vm846, %v1221, 0.0
      %v1331 = vadd.f32 %v1329, %v1330
      %v1332 = vsel %vm846, %v1222, 0.0
      %v1333 = vadd.f32 %v1331, %v1332
      %v1334 = vsel %vm846, %v1223, 0.0
      %v1335 = vadd.f32 %v1333, %v1334
      %v1336 = vsel %vm846, %v1224, 0.0
      %v1337 = vadd.f32 %v1335, %v1336
      %v1338 = vsel %vm846, %v1225, 0.0
      %v1339 = vadd.f32 %v1337, %v1338
      %v1340 = vsel %vm846, %v1226, 0.0
      %v1341 = vadd.f32 %v1339, %v1340
      %v1342 = vsel %vm846, %v1227, 0.0
      %v1343 = vadd.f32 %v1341, %v1342
      %v1344 = vsel %vm846, %v1228, 0.0
      %v1345 = vadd.f32 %v1343, %v1344
      %v1346 = vsel %vm846, %v1229, 0.0
      %v1347 = vadd.f32 %v1345, %v1346
      %v1348 = vsel %vm846, %v1230, 0.0
      %v1349 = vadd.f32 %v1347, %v1348
      %v1350 = vsel %vm846, %v1231, 0.0
      %v1351 = vadd.f32 %v1349, %v1350
      %v1352 = vsel %vm846, %v1232, 0.0
      %v1353 = vadd.f32 %v1351, %v1352
      %v1354 = vsel %vm846, %v1233, 0.0
      %v1355 = vadd.f32 %v1353, %v1354
      %v1356 = vsel %vm846, %v1234, 0.0
      %v1357 = vadd.f32 %v1355, %v1356
      %v1358 = vsel %vm846, %v1235, 0.0
      %v1359 = vadd.f32 %v1357, %v1358
      %v1360 = vsel %vm846, %v1236, 0.0
      %v1361 = vadd.f32 %v1359, %v1360
      %v1362 = vsel %vm846, %v1237, 0.0
      %v1363 = vadd.f32 %v1361, %v1362
      %v1364 = vsel %vm846, %v1238, 0.0
      %v1365 = vadd.f32 %v1363, %v1364
      %v1366 = vrot.slane %v1365, 4
      %v1367 = vadd.f32 %v1365, %v1366
      %v1368 = vrot.slane %v1367, 2
      %v1369 = vadd.f32 %v1367, %v1368
      %v1370 = vrot.slane %v1369, 1
      %v1371 = vadd.f32 %v1369, %v1370
      %vm1372 = vcmask 1040384
      %v1373 = vsel %vm1372, %v1174, %v1371
      %vm1374 = vcmask 517120
      %1375 = vst.msk [vmem:[#allocation3] sm:$0x3] %vm1374, %v1373
    $region17: #{tpu_custom_call.1} parent=1 // pred_fallthru
      _
    // Predicated region
    $region18: #{tpu_custom_call.1} parent=1 // pred_check
      _
    $region19: #{tpu_custom_call.1} parent=1 // pred_check_branch
      %1377 = sbr.rel (0) target = $region21
    $region20: #{tpu_custom_call.1} parent=1 // pred_region
      _
    $region21: #{tpu_custom_call.1} parent=1 // pred_fallthru
      _
    // Predicated region
    $region22: #{tpu_custom_call.1} parent=1 // pred_check
      _
    $region23: #{tpu_custom_call.1} parent=1 // pred_check_branch
      %1379 = sbr.rel (0) target = $region25
    $region24: #{tpu_custom_call.1} parent=1 // pred_region
      %s1381 = ssub.s32 32, 32
      %1382 = vsyncadd [#allocation4], %s1381
      %s1384 = sshll.u32 [#allocation3], 4
      %s1385 = int_to_ptr.vmem [resolvable:$true] %s1384
      %1387 = dma.vmem_to_hbm [thread:$0]  %s1385, 32, %s3, [#allocation4]
    $region25: #{tpu_custom_call.1} parent=1 // pred_fallthru
      _
    // Predicated region
    $region26: #{tpu_custom_call.1} parent=1 // pred_check
      _
    $region27: #{tpu_custom_call.1} parent=1 // pred_check_branch
      %1389 = sbr.rel (0) target = $region29
    $region28: #{tpu_custom_call.1} parent=1 // pred_region
      _
    $region29: #{tpu_custom_call.1} parent=1 // pred_fallthru
      _
    // Predicated region
    $region30: #{tpu_custom_call.1} parent=1 // pred_check
      _
    $region31: #{tpu_custom_call.1} parent=1 // pred_check_branch
      %1391 = sbr.rel (0) target = $region33
    $region32: #{tpu_custom_call.1} parent=1 // pred_region
      %1392 = dma.done [#allocation4], 32
    $region33: #{tpu_custom_call.1} parent=1 // pred_fallthru
      _
    %1393 = vsyncpa [#allocation4], 1

</llo_original>
